<compile_context>
chip_gen: v6e
topology: v6e:2x2x1
jax: 0.10.0
libtpu: 0.0.40
codegen_flags: <defaults>
</compile_context>

<pallas_src>
import functools
import math

import jax
import jax.numpy as jnp
from jax.experimental import pallas as pl
from jax.experimental.pallas import tpu as pltpu


# ---------------------------------------------------------------------------
# In-kernel helpers (traced inside the Pallas kernel body)
# ---------------------------------------------------------------------------
def _layernorm(x, gamma, beta, eps=1e-5):
    # x: (M, C) f32, gamma/beta: (1, C) f32 — statistics in f32.
    mu = jnp.mean(x, axis=-1, keepdims=True)
    var = jnp.mean((x - mu) ** 2, axis=-1, keepdims=True)
    return (x - mu) * jax.lax.rsqrt(var + eps) * gamma + beta


def _gelu_tanh(x):
    # tanh-approx GELU: tanh goes to the EUP slot instead of a long erf
    # polynomial on the VALU.  Max deviation from erf-GELU ~3e-3 (documented).
    c = math.sqrt(2.0 / math.pi)
    return 0.5 * x * (1.0 + jnp.tanh(c * (x + 0.044715 * x * x * x)))


# ---------------------------------------------------------------------------
# Fused Pallas kernel: grid = (batch_tiles, num_layers)
# The output block (index constant along the layer axis) doubles as the
# VMEM-resident f32 residual stream between layers.
# ---------------------------------------------------------------------------
def transformer_kernel(
    x_ref,                               # (BT, N, C)  f32 input
    png_ref, pnb_ref,                    # (1, 1, C)   pre_norm gamma/beta (f32)
    wqkv_ref,                            # (1, C, 3C)  fused qkv weight, bf16, q pre-scaled
    wp_ref, bp_ref,                      # (1, C, C) bf16, (1, 1, C) f32
    n1g_ref, n1b_ref,                    # (1, 1, C)   norm1 gamma/beta (f32)
    w1_ref, b1_ref,                      # (1, C, C) bf16, (1, 1, C) f32
    w2_ref, b2_ref,                      # (1, C, C) bf16, (1, 1, C) f32
    fg_ref, fb_ref,                      # (1, C)      final LayerNorm gamma/beta (f32)
    o_ref,                               # (BT, N, C)  f32 output == resident residual stream
    *, num_heads,
):
    l = pl.program_id(1)
    BT, N, C = x_ref.shape
    M = BT * N
    H = num_heads
    hd = C // H

    # First layer step for this batch tile: load input into the resident buffer.
    @pl.when(l == 0)
    def _():
        o_ref[...] = x_ref[...].astype(o_ref.dtype)

    src = o_ref[...].reshape(M, C).astype(jnp.float32)     # flatten batch into matmul M

    # ---- attention branch (pre-norm) ----
    h = _layernorm(src, png_ref[0], pnb_ref[0])
    # bf16 operands, f32 accumulation (native MXU fast path).
    qkv = jnp.dot(h.astype(jnp.bfloat16), wqkv_ref[0],
                  preferred_element_type=jnp.float32)       # (M, 3C) f32

    # Per-head attention via STATIC column slices — no 4-D transposes / relayouts.
    ctx_heads = []
    for hh in range(H):
        q = qkv[:, hh * hd:(hh + 1) * hd].reshape(BT, N, hd).astype(jnp.bfloat16)
        k = qkv[:, C + hh * hd:C + (hh + 1) * hd].reshape(BT, N, hd).astype(jnp.bfloat16)
        v = qkv[:, 2 * C + hh * hd:2 * C + (hh + 1) * hd].reshape(BT, N, hd).astype(jnp.bfloat16)
        # scale (head_dim**-0.5) is folded into the q columns of wqkv at init time.
        s = jnp.einsum('bnd,bmd->bnm', q, k, preferred_element_type=jnp.float32)
        s = s - jnp.max(s, axis=-1, keepdims=True)
        p = jnp.exp(s)
        p = p * pl.reciprocal(jnp.sum(p, axis=-1, keepdims=True), approx=True)
        ctx_h = jnp.einsum('bnm,bmd->bnd', p.astype(jnp.bfloat16), v,
                           preferred_element_type=jnp.float32)
        ctx_heads.append(ctx_h.reshape(M, hd))
    ctx = ctx_heads[0] if H == 1 else jnp.concatenate(ctx_heads, axis=-1)   # (M, C)

    attn_out = jnp.dot(ctx.astype(jnp.bfloat16), wp_ref[0],
                       preferred_element_type=jnp.float32) + bp_ref[0]

    # ---- residual + norm1 + MLP (dropout p=0 -> identity) ----
    src = src + attn_out
    src = _layernorm(src, n1g_ref[0], n1b_ref[0])
    h1 = _gelu_tanh(jnp.dot(src.astype(jnp.bfloat16), w1_ref[0],
                            preferred_element_type=jnp.float32) + b1_ref[0])
    h2 = jnp.dot(h1.astype(jnp.bfloat16), w2_ref[0],
                 preferred_element_type=jnp.float32) + b2_ref[0]
    new_src = src + h2

    # Keep the residual stream resident in VMEM (f32) across layers.
    o_ref[...] = new_src.reshape(BT, N, C).astype(o_ref.dtype)

    # Last layer step: apply the final LayerNorm; HBM writeback happens once per
    # batch tile since the out block index is constant along the layer axis.
    @pl.when(l == pl.num_programs(1) - 1)
    def _():
        y = _layernorm(new_src, fg_ref[...], fb_ref[...])
        o_ref[...] = y.reshape(BT, N, C).astype(o_ref.dtype)


# ---------------------------------------------------------------------------
# Roofline / VMEM-driven batch-tile selection.
# ---------------------------------------------------------------------------
def _pick_batch_tile(B, N, C, H, vmem_budget=48 * 1024 * 1024, target_rows=512):
    """Largest divisor of B whose footprint fits ~48 MiB (safe under v7x 64 MiB);
    prefer giving both TensorCores a grid step once the matmul M dim is ample."""
    wbytes = 2                                            # bf16 weights
    per_layer_w = 6 * C * C * wbytes + 8 * C * 4          # wqkv+wp+w1+w2 + biases/LN vecs

    def footprint(bt):
        m = bt * N
        act = (bt * N * C * 4            # resident output / residual stream (f32)
               + 2 * bt * N * C * 4      # double-buffered x input block (f32)
               + m * 3 * C * 4           # qkv result (f32)
               + bt * H * N * N * 4      # attention scores (f32, worst case)
               + 3 * m * C * 4)          # ctx / MLP temporaries
        return act + 2 * per_layer_w     # double-buffered per-layer weights

    divisors = [d for d in range(1, B + 1) if B % d == 0]
    feasible = [d for d in divisors if footprint(d) <= vmem_budget] or [1]
    bt = max(feasible)                                    # maximize M = BT*N (amortize weight DMA)
    both_tc = [d for d in feasible if B // d >= 2 and d * N >= target_rows]
    if both_tc:
        bt = max(both_tc)                                 # megacore: both TCs get work
    return bt


# ---------------------------------------------------------------------------
# Wrapper: one pallas_call for the whole forward pass
# ---------------------------------------------------------------------------
def transformer_forward(x, params, num_heads, batch_tile=None):
    B, N, C = x.shape
    L = params["wqkv"].shape[0]
    assert C % num_heads == 0
    x = x.astype(jnp.float32)             # residual stream accumulates in f32 (in o_ref)

    if batch_tile is None:
        batch_tile = _pick_batch_tile(B, N, C, num_heads)
    BT = batch_tile
    assert B % BT == 0

    grid = (B // BT, L)                   # layers MUST be the innermost (sequential) axis
    x_spec = pl.BlockSpec((BT, N, C), lambda r, l: (r, 0, 0))
    lvec = pl.BlockSpec((1, 1, C), lambda r, l: (l, 0, 0))
    lmat = pl.BlockSpec((1, C, C), lambda r, l: (l, 0, 0))
    lqkv = pl.BlockSpec((1, C, 3 * C), lambda r, l: (l, 0, 0))
    fvec = pl.BlockSpec((1, C), lambda r, l: (0, 0))
    # TODO(synk): if weight DMA is still exposed for small C, add
    # pipeline_mode=pl.Buffered(3) to the weight BlockSpecs and sweep 2 vs 3.

    kern = functools.partial(transformer_kernel, num_heads=num_heads)
    return pl.pallas_call(
        kern,
        out_shape=jax.ShapeDtypeStruct((B, N, C), jnp.float32),
        grid=grid,
        in_specs=[
            x_spec,
            lvec, lvec,          # pre_norm gamma, beta
            lqkv,                # fused qkv weight (bf16, q columns pre-scaled)
            lmat, lvec,          # attn out-proj weight (bf16), bias
            lvec, lvec,          # norm1 gamma, beta
            lmat, lvec,          # linear1 weight (bf16), bias
            lmat, lvec,          # linear2 weight (bf16), bias
            fvec, fvec,          # final LayerNorm gamma, beta
        ],
        out_specs=x_spec,
        compiler_params=pltpu.CompilerParams(
            dimension_semantics=("parallel", "arbitrary"),
            vmem_limit_bytes=56 * 1024 * 1024),   # headroom under v7x 64 MiB physical
    )(
        x,
        params["pre_norm_g"], params["pre_norm_b"],
        params["wqkv"],
        params["wp"], params["bp"],
        params["norm1_g"], params["norm1_b"],
        params["w1"], params["b1"],
        params["w2"], params["b2"],
        params["final_g"], params["final_b"],
    )


# ---------------------------------------------------------------------------
# Deterministic parameter init (mirrors Transformer.init_weight).
# Linear weights are stored pre-transposed ((in, out)) and in bf16 so kernels
# compute x @ W on the native MXU path; the attention scale head_dim**-0.5 is
# folded into the q columns of wqkv before the bf16 cast.  Biases/LN params f32.
# ---------------------------------------------------------------------------
def init_params(key, embedding_dim, num_layers, num_heads):
    C, L = embedding_dim, num_layers
    scale = float((C // num_heads) ** (-0.5))

    def trunc_normal(k, shape):
        return 0.02 * jax.random.truncated_normal(k, -2.0, 2.0, shape, jnp.float32)

    keys = jax.random.split(key, 4 * L)
    wqkv = jnp.stack([trunc_normal(keys[4 * i + 0], (C, 3 * C)) for i in range(L)])
    wqkv = wqkv.at[:, :, :C].multiply(scale)      # fold attention scale into q
    wp = jnp.stack([trunc_normal(keys[4 * i + 1], (C, C)) for i in range(L)])
    w1 = jnp.stack([trunc_normal(keys[4 * i + 2], (C, C)) for i in range(L)])
    w2 = jnp.stack([trunc_normal(keys[4 * i + 3], (C, C)) for i in range(L)])

    bf = lambda a: a.astype(jnp.bfloat16)
    ones = jnp.ones((L, 1, C), jnp.float32)
    zeros = jnp.zeros((L, 1, C), jnp.float32)
    return dict(
        wqkv=bf(wqkv),
        wp=bf(wp), bp=zeros,
        w1=bf(w1), b1=zeros,
        w2=bf(w2), b2=zeros,
        pre_norm_g=ones, pre_norm_b=zeros,
        norm1_g=ones, norm1_b=zeros,
        final_g=jnp.ones((1, C), jnp.float32),
        final_b=jnp.zeros((1, C), jnp.float32),
    )


# ---------------------------------------------------------------------------
# Pure-JAX reference (f32 math, same pre-scaled weights upcast from bf16,
# exact erf GELU / exact divide) for a sanity check against module semantics.
# ---------------------------------------------------------------------------
def reference_forward(x, p, num_heads):
    B, N, C = x.shape
    H = num_heads
    hd = C // H
    L = p["wqkv"].shape[0]
    f32 = lambda a: a.astype(jnp.float32)

    def ln(t, g, b, eps=1e-5):
        mu = t.mean(-1, keepdims=True)
        var = ((t - mu) ** 2).mean(-1, keepdims=True)
        return (t - mu) / jnp.sqrt(var + eps) * g + b

    src = f32(x)
    for l in range(L):
        h = ln(src, p["pre_norm_g"][l, 0], p["pre_norm_b"][l, 0])
        qkv = h @ f32(p["wqkv"][l])
        q = qkv[..., :C].reshape(B, N, H, hd).transpose(0, 2, 1, 3)
        k = qkv[..., C:2 * C].reshape(B, N, H, hd).transpose(0, 2, 1, 3)
        v = qkv[..., 2 * C:].reshape(B, N, H, hd).transpose(0, 2, 1, 3)
        a = jax.nn.softmax(q @ k.transpose(0, 1, 3, 2), axis=-1)
        ctx = (a @ v).transpose(0, 2, 1, 3).reshape(B, N, C)
        src = src + ctx @ f32(p["wp"][l]) + p["bp"][l, 0]
        src = ln(src, p["norm1_g"][l, 0], p["norm1_b"][l, 0])
        h1 = jax.nn.gelu(src @ f32(p["w1"][l]) + p["b1"][l, 0], approximate=False)
        src = src + h1 @ f32(p["w2"][l]) + p["b2"][l, 0]
    return ln(src, p["final_g"][0], p["final_b"][0])


if __name__ == "__main__":
    # Shapes consistent with Transformer(embedding_dim=64, num_layers=2, num_heads=2)
    B, N, C = 2, 8, 64
    NUM_LAYERS, NUM_HEADS = 2, 2

    key = jax.random.PRNGKey(0)
    key, xk, pk = jax.random.split(key, 3)
    x = jax.random.normal(xk, (B, N, C), dtype=jnp.float32)
    params = init_params(pk, C, NUM_LAYERS, NUM_HEADS)

    out = transformer_forward(x, params, num_heads=NUM_HEADS)
    jax.block_until_ready(out)
    assert out.shape == (B, N, C)

    # Sanity check against the pure-JAX reference.  Tolerance covers bf16 matmul
    # operands, tanh-approx GELU and approx reciprocal vs the exact-f32 reference.
    ref = reference_forward(x, params, NUM_HEADS)
    err = float(jnp.max(jnp.abs(out - ref)))
    assert err < 5e-2, f"max abs error {err}"

    print("KERNEL_OK")
</pallas_src>

<mosaic_0001>
module attributes {stable_mosaic.version = 11 : i64} {
  func.func @transformer_kernel(%arg0: i32, %arg1: i32, %arg2: memref<2x8x64xf32, #tpu.memory_space<vmem>>, %arg3: memref<1x1x64xf32, #tpu.memory_space<vmem>>, %arg4: memref<1x1x64xf32, #tpu.memory_space<vmem>>, %arg5: memref<1x64x192xbf16, #tpu.memory_space<vmem>>, %arg6: memref<1x64x64xbf16, #tpu.memory_space<vmem>>, %arg7: memref<1x1x64xf32, #tpu.memory_space<vmem>>, %arg8: memref<1x1x64xf32, #tpu.memory_space<vmem>>, %arg9: memref<1x1x64xf32, #tpu.memory_space<vmem>>, %arg10: memref<1x64x64xbf16, #tpu.memory_space<vmem>>, %arg11: memref<1x1x64xf32, #tpu.memory_space<vmem>>, %arg12: memref<1x64x64xbf16, #tpu.memory_space<vmem>>, %arg13: memref<1x1x64xf32, #tpu.memory_space<vmem>>, %arg14: memref<1x64xf32, #tpu.memory_space<vmem>>, %arg15: memref<1x64xf32, #tpu.memory_space<vmem>>, %arg16: memref<2x8x64xf32, #tpu.memory_space<vmem>>) attributes {dimension_semantics = [#tpu.dimension_semantics<parallel>, #tpu.dimension_semantics<arbitrary>], iteration_bounds = array<i64: 1, 2>, scalar_prefetch = 0 : i64, scratch_operands = 0 : i64, tpu.core_type = #tpu.core_type<tc>, window_params = [{transform_indices = @transform_0, window_bounds = array<i64: 2, 8, 64>}, {transform_indices = @transform_1, window_bounds = array<i64: 1, 1, 64>}, {transform_indices = @transform_2, window_bounds = array<i64: 1, 1, 64>}, {transform_indices = @transform_3, window_bounds = array<i64: 1, 64, 192>}, {transform_indices = @transform_4, window_bounds = array<i64: 1, 64, 64>}, {transform_indices = @transform_5, window_bounds = array<i64: 1, 1, 64>}, {transform_indices = @transform_6, window_bounds = array<i64: 1, 1, 64>}, {transform_indices = @transform_7, window_bounds = array<i64: 1, 1, 64>}, {transform_indices = @transform_8, window_bounds = array<i64: 1, 64, 64>}, {transform_indices = @transform_9, window_bounds = array<i64: 1, 1, 64>}, {transform_indices = @transform_10, window_bounds = array<i64: 1, 64, 64>}, {transform_indices = @transform_11, window_bounds = array<i64: 1, 1, 64>}, {pipeline_mode = #tpu.pipeline_mode<synchronous>, transform_indices = @transform_12, window_bounds = array<i64: 1, 64>}, {pipeline_mode = #tpu.pipeline_mode<synchronous>, transform_indices = @transform_13, window_bounds = array<i64: 1, 64>}, {transform_indices = @transform_14, window_bounds = array<i64: 2, 8, 64>}]} {
    %c0_i32 = arith.constant 0 : i32
    %0 = arith.cmpi eq, %arg1, %c0_i32 : i32
    %1 = arith.extui %0 : i1 to i32
    %c0_i32_0 = arith.constant 0 : i32
    %2 = arith.cmpi ne, %1, %c0_i32_0 : i32
    scf.if %2 {
      %c0_65 = arith.constant 0 : index
      %c0_66 = arith.constant 0 : index
      %c0_67 = arith.constant 0 : index
      %152 = vector.load %arg2[%c0_65, %c0_66, %c0_67] : memref<2x8x64xf32, #tpu.memory_space<vmem>>, vector<2x8x64xf32>
      %c0_68 = arith.constant 0 : index
      %c0_69 = arith.constant 0 : index
      %c0_70 = arith.constant 0 : index
      %153 = vector.load %arg16[%c0_68, %c0_69, %c0_70] : memref<2x8x64xf32, #tpu.memory_space<vmem>>, vector<2x8x64xf32>
      tpu.vector_store %arg16[%c0_68, %c0_69, %c0_70], %152 {strides = array<i32>} : memref<2x8x64xf32, #tpu.memory_space<vmem>>, vector<2x8x64xf32>,
    } else {
    }
    %c0 = arith.constant 0 : index
    %c0_1 = arith.constant 0 : index
    %c0_2 = arith.constant 0 : index
    %3 = vector.load %arg16[%c0, %c0_1, %c0_2] : memref<2x8x64xf32, #tpu.memory_space<vmem>>, vector<2x8x64xf32>
    %4 = vector.shape_cast %3 : vector<2x8x64xf32> to vector<16x64xf32>
    %c0_3 = arith.constant 0 : index
    %c0_4 = arith.constant 0 : index
    %c0_5 = arith.constant 0 : index
    %5 = vector.load %arg3[%c0_3, %c0_4, %c0_5] : memref<1x1x64xf32, #tpu.memory_space<vmem>>, vector<1x1x64xf32>
    %6 = vector.shape_cast %5 : vector<1x1x64xf32> to vector<1x64xf32>
    %c0_6 = arith.constant 0 : index
    %c0_7 = arith.constant 0 : index
    %c0_8 = arith.constant 0 : index
    %7 = vector.load %arg4[%c0_6, %c0_7, %c0_8] : memref<1x1x64xf32, #tpu.memory_space<vmem>>, vector<1x1x64xf32>
    %8 = vector.shape_cast %7 : vector<1x1x64xf32> to vector<1x64xf32>
    %cst = arith.constant dense<0.000000e+00> : vector<16xf32>
    %9 = vector.multi_reduction <add>, %4, %cst [1] : vector<16x64xf32> to vector<16xf32>
    %10 = vector.shape_cast %9 : vector<16xf32> to vector<16x1xf32>
    %cst_9 = arith.constant 6.400000e+01 : f32
    %11 = vector.broadcast %cst_9 : f32 to vector<16x1xf32>
    %12 = arith.divf %10, %11 : vector<16x1xf32>
    %13 = vector.broadcast %12 : vector<16x1xf32> to vector<16x64xf32>
    %14 = arith.subf %4, %13 : vector<16x64xf32>
    %15 = arith.mulf %14, %14 : vector<16x64xf32>
    %cst_10 = arith.constant dense<0.000000e+00> : vector<16xf32>
    %16 = vector.multi_reduction <add>, %15, %cst_10 [1] : vector<16x64xf32> to vector<16xf32>
    %17 = vector.shape_cast %16 : vector<16xf32> to vector<16x1xf32>
    %cst_11 = arith.constant 6.400000e+01 : f32
    %18 = vector.broadcast %cst_11 : f32 to vector<16x1xf32>
    %19 = arith.divf %17, %18 : vector<16x1xf32>
    %20 = vector.broadcast %12 : vector<16x1xf32> to vector<16x64xf32>
    %21 = arith.subf %4, %20 : vector<16x64xf32>
    %cst_12 = arith.constant 9.99999974E-6 : f32
    %22 = vector.broadcast %cst_12 : f32 to vector<16x1xf32>
    %23 = arith.addf %19, %22 : vector<16x1xf32>
    %24 = math.rsqrt %23 : vector<16x1xf32>
    %25 = vector.broadcast %24 : vector<16x1xf32> to vector<16x64xf32>
    %26 = arith.mulf %21, %25 : vector<16x64xf32>
    %27 = vector.broadcast %6 : vector<1x64xf32> to vector<16x64xf32>
    %28 = arith.mulf %26, %27 : vector<16x64xf32>
    %29 = vector.broadcast %8 : vector<1x64xf32> to vector<16x64xf32>
    %30 = arith.addf %28, %29 : vector<16x64xf32>
    %31 = arith.truncf %30 : vector<16x64xf32> to vector<16x64xbf16>
    %c0_13 = arith.constant 0 : index
    %c0_14 = arith.constant 0 : index
    %c0_15 = arith.constant 0 : index
    %32 = vector.load %arg5[%c0_13, %c0_14, %c0_15] : memref<1x64x192xbf16, #tpu.memory_space<vmem>>, vector<1x64x192xbf16>
    %33 = vector.shape_cast %32 : vector<1x64x192xbf16> to vector<64x192xbf16>
    %cst_16 = arith.constant dense<0.000000e+00> : vector<16x192xf32>
    %34 = tpu.matmul %31, %33, %cst_16 {dimension_numbers = #tpu.dot_dimension_numbers<[1], [0], [0], [1], [0, 0, 1, 1], [], []>} : vector<16x64xbf16>, vector<64x192xbf16>, vector<16x192xf32> -> vector<16x192xf32>
    %35 = vector.extract_strided_slice %34 {offsets = [0, 0], sizes = [16, 32], strides = [1, 1]} : vector<16x192xf32> to vector<16x32xf32>
    %36 = vector.shape_cast %35 : vector<16x32xf32> to vector<2x8x32xf32>
    %37 = arith.truncf %36 : vector<2x8x32xf32> to vector<2x8x32xbf16>
    %38 = vector.extract_strided_slice %34 {offsets = [0, 64], sizes = [16, 32], strides = [1, 1]} : vector<16x192xf32> to vector<16x32xf32>
    %39 = vector.shape_cast %38 : vector<16x32xf32> to vector<2x8x32xf32>
    %40 = arith.truncf %39 : vector<2x8x32xf32> to vector<2x8x32xbf16>
    %41 = vector.extract_strided_slice %34 {offsets = [0, 128], sizes = [16, 32], strides = [1, 1]} : vector<16x192xf32> to vector<16x32xf32>
    %42 = vector.shape_cast %41 : vector<16x32xf32> to vector<2x8x32xf32>
    %43 = arith.truncf %42 : vector<2x8x32xf32> to vector<2x8x32xbf16>
    "tpu.trace_start"() <{level = 10 : i32, message = "bnd,bmd->bnm"}> : () -> ()
    %cst_17 = arith.constant dense<0.000000e+00> : vector<2x8x8xf32>
    %44 = tpu.matmul %37, %40, %cst_17 {dimension_numbers = #tpu.dot_dimension_numbers<[2], [2], [1], [1], [0, 0, 0, 1, 1, 1], [0], [0]>} : vector<2x8x32xbf16>, vector<2x8x32xbf16>, vector<2x8x8xf32> -> vector<2x8x8xf32>
    "tpu.trace_stop"() : () -> ()
    %cst_18 = arith.constant dense<0xFF800000> : vector<2x8xf32>
    %45 = vector.multi_reduction <maximumf>, %44, %cst_18 [2] : vector<2x8x8xf32> to vector<2x8xf32>
    %46 = vector.shape_cast %45 : vector<2x8xf32> to vector<2x8x1xf32>
    %47 = vector.broadcast %46 : vector<2x8x1xf32> to vector<2x8x8xf32>
    %48 = arith.subf %44, %47 : vector<2x8x8xf32>
    %49 = math.exp %48 : vector<2x8x8xf32>
    %cst_19 = arith.constant dense<0.000000e+00> : vector<2x8xf32>
    %50 = vector.multi_reduction <add>, %49, %cst_19 [2] : vector<2x8x8xf32> to vector<2x8xf32>
    %51 = vector.shape_cast %50 : vector<2x8xf32> to vector<2x8x1xf32>
    %52 = tpu.reciprocal %51 {approx = true} : vector<2x8x1xf32> -> vector<2x8x1xf32>
    %53 = vector.broadcast %52 : vector<2x8x1xf32> to vector<2x8x8xf32>
    %54 = arith.mulf %49, %53 : vector<2x8x8xf32>
    %55 = arith.truncf %54 : vector<2x8x8xf32> to vector<2x8x8xbf16>
    "tpu.trace_start"() <{level = 10 : i32, message = "bnm,bmd->bnd"}> : () -> ()
    %cst_20 = arith.constant dense<0.000000e+00> : vector<2x8x32xf32>
    %56 = tpu.matmul %55, %43, %cst_20 {dimension_numbers = #tpu.dot_dimension_numbers<[2], [1], [1], [2], [0, 0, 0, 1, 1, 2], [0], [0]>} : vector<2x8x8xbf16>, vector<2x8x32xbf16>, vector<2x8x32xf32> -> vector<2x8x32xf32>
    "tpu.trace_stop"() : () -> ()
    %57 = vector.shape_cast %56 : vector<2x8x32xf32> to vector<16x32xf32>
    %58 = vector.extract_strided_slice %34 {offsets = [0, 32], sizes = [16, 32], strides = [1, 1]} : vector<16x192xf32> to vector<16x32xf32>
    %59 = vector.shape_cast %58 : vector<16x32xf32> to vector<2x8x32xf32>
    %60 = arith.truncf %59 : vector<2x8x32xf32> to vector<2x8x32xbf16>
    %61 = vector.extract_strided_slice %34 {offsets = [0, 96], sizes = [16, 32], strides = [1, 1]} : vector<16x192xf32> to vector<16x32xf32>
    %62 = vector.shape_cast %61 : vector<16x32xf32> to vector<2x8x32xf32>
    %63 = arith.truncf %62 : vector<2x8x32xf32> to vector<2x8x32xbf16>
    %64 = vector.extract_strided_slice %34 {offsets = [0, 160], sizes = [16, 32], strides = [1, 1]} : vector<16x192xf32> to vector<16x32xf32>
    %65 = vector.shape_cast %64 : vector<16x32xf32> to vector<2x8x32xf32>
    %66 = arith.truncf %65 : vector<2x8x32xf32> to vector<2x8x32xbf16>
    "tpu.trace_start"() <{level = 10 : i32, message = "bnd,bmd->bnm"}> : () -> ()
    %cst_21 = arith.constant dense<0.000000e+00> : vector<2x8x8xf32>
    %67 = tpu.matmul %60, %63, %cst_21 {dimension_numbers = #tpu.dot_dimension_numbers<[2], [2], [1], [1], [0, 0, 0, 1, 1, 1], [0], [0]>} : vector<2x8x32xbf16>, vector<2x8x32xbf16>, vector<2x8x8xf32> -> vector<2x8x8xf32>
    "tpu.trace_stop"() : () -> ()
    %cst_22 = arith.constant dense<0xFF800000> : vector<2x8xf32>
    %68 = vector.multi_reduction <maximumf>, %67, %cst_22 [2] : vector<2x8x8xf32> to vector<2x8xf32>
    %69 = vector.shape_cast %68 : vector<2x8xf32> to vector<2x8x1xf32>
    %70 = vector.broadcast %69 : vector<2x8x1xf32> to vector<2x8x8xf32>
    %71 = arith.subf %67, %70 : vector<2x8x8xf32>
    %72 = math.exp %71 : vector<2x8x8xf32>
    %cst_23 = arith.constant dense<0.000000e+00> : vector<2x8xf32>
    %73 = vector.multi_reduction <add>, %72, %cst_23 [2] : vector<2x8x8xf32> to vector<2x8xf32>
    %74 = vector.shape_cast %73 : vector<2x8xf32> to vector<2x8x1xf32>
    %75 = tpu.reciprocal %74 {approx = true} : vector<2x8x1xf32> -> vector<2x8x1xf32>
    %76 = vector.broadcast %75 : vector<2x8x1xf32> to vector<2x8x8xf32>
    %77 = arith.mulf %72, %76 : vector<2x8x8xf32>
    %78 = arith.truncf %77 : vector<2x8x8xf32> to vector<2x8x8xbf16>
    "tpu.trace_start"() <{level = 10 : i32, message = "bnm,bmd->bnd"}> : () -> ()
    %cst_24 = arith.constant dense<0.000000e+00> : vector<2x8x32xf32>
    %79 = tpu.matmul %78, %66, %cst_24 {dimension_numbers = #tpu.dot_dimension_numbers<[2], [1], [1], [2], [0, 0, 0, 1, 1, 2], [0], [0]>} : vector<2x8x8xbf16>, vector<2x8x32xbf16>, vector<2x8x32xf32> -> vector<2x8x32xf32>
    "tpu.trace_stop"() : () -> ()
    %80 = vector.shape_cast %79 : vector<2x8x32xf32> to vector<16x32xf32>
    %81 = tpu.concatenate %57, %80 in 1 : vector<16x32xf32>, vector<16x32xf32> -> vector<16x64xf32>
    %82 = arith.truncf %81 : vector<16x64xf32> to vector<16x64xbf16>
    %c0_25 = arith.constant 0 : index
    %c0_26 = arith.constant 0 : index
    %c0_27 = arith.constant 0 : index
    %83 = vector.load %arg6[%c0_25, %c0_26, %c0_27] : memref<1x64x64xbf16, #tpu.memory_space<vmem>>, vector<1x64x64xbf16>
    %84 = vector.shape_cast %83 : vector<1x64x64xbf16> to vector<64x64xbf16>
    %cst_28 = arith.constant dense<0.000000e+00> : vector<16x64xf32>
    %85 = tpu.matmul %82, %84, %cst_28 {dimension_numbers = #tpu.dot_dimension_numbers<[1], [0], [0], [1], [0, 0, 1, 1], [], []>} : vector<16x64xbf16>, vector<64x64xbf16>, vector<16x64xf32> -> vector<16x64xf32>
    %c0_29 = arith.constant 0 : index
    %c0_30 = arith.constant 0 : index
    %c0_31 = arith.constant 0 : index
    %86 = vector.load %arg7[%c0_29, %c0_30, %c0_31] : memref<1x1x64xf32, #tpu.memory_space<vmem>>, vector<1x1x64xf32>
    %87 = vector.shape_cast %86 : vector<1x1x64xf32> to vector<1x64xf32>
    %88 = vector.broadcast %87 : vector<1x64xf32> to vector<16x64xf32>
    %89 = arith.addf %85, %88 : vector<16x64xf32>
    %90 = arith.addf %4, %89 : vector<16x64xf32>
    %c0_32 = arith.constant 0 : index
    %c0_33 = arith.constant 0 : index
    %c0_34 = arith.constant 0 : index
    %91 = vector.load %arg8[%c0_32, %c0_33, %c0_34] : memref<1x1x64xf32, #tpu.memory_space<vmem>>, vector<1x1x64xf32>
    %92 = vector.shape_cast %91 : vector<1x1x64xf32> to vector<1x64xf32>
    %c0_35 = arith.constant 0 : index
    %c0_36 = arith.constant 0 : index
    %c0_37 = arith.constant 0 : index
    %93 = vector.load %arg9[%c0_35, %c0_36, %c0_37] : memref<1x1x64xf32, #tpu.memory_space<vmem>>, vector<1x1x64xf32>
    %94 = vector.shape_cast %93 : vector<1x1x64xf32> to vector<1x64xf32>
    %cst_38 = arith.constant dense<0.000000e+00> : vector<16xf32>
    %95 = vector.multi_reduction <add>, %90, %cst_38 [1] : vector<16x64xf32> to vector<16xf32>
    %96 = vector.shape_cast %95 : vector<16xf32> to vector<16x1xf32>
    %cst_39 = arith.constant 6.400000e+01 : f32
    %97 = vector.broadcast %cst_39 : f32 to vector<16x1xf32>
    %98 = arith.divf %96, %97 : vector<16x1xf32>
    %99 = vector.broadcast %98 : vector<16x1xf32> to vector<16x64xf32>
    %100 = arith.subf %90, %99 : vector<16x64xf32>
    %101 = arith.mulf %100, %100 : vector<16x64xf32>
    %cst_40 = arith.constant dense<0.000000e+00> : vector<16xf32>
    %102 = vector.multi_reduction <add>, %101, %cst_40 [1] : vector<16x64xf32> to vector<16xf32>
    %103 = vector.shape_cast %102 : vector<16xf32> to vector<16x1xf32>
    %cst_41 = arith.constant 6.400000e+01 : f32
    %104 = vector.broadcast %cst_41 : f32 to vector<16x1xf32>
    %105 = arith.divf %103, %104 : vector<16x1xf32>
    %106 = vector.broadcast %98 : vector<16x1xf32> to vector<16x64xf32>
    %107 = arith.subf %90, %106 : vector<16x64xf32>
    %cst_42 = arith.constant 9.99999974E-6 : f32
    %108 = vector.broadcast %cst_42 : f32 to vector<16x1xf32>
    %109 = arith.addf %105, %108 : vector<16x1xf32>
    %110 = math.rsqrt %109 : vector<16x1xf32>
    %111 = vector.broadcast %110 : vector<16x1xf32> to vector<16x64xf32>
    %112 = arith.mulf %107, %111 : vector<16x64xf32>
    %113 = vector.broadcast %92 : vector<1x64xf32> to vector<16x64xf32>
    %114 = arith.mulf %112, %113 : vector<16x64xf32>
    %115 = vector.broadcast %94 : vector<1x64xf32> to vector<16x64xf32>
    %116 = arith.addf %114, %115 : vector<16x64xf32>
    %117 = arith.truncf %116 : vector<16x64xf32> to vector<16x64xbf16>
    %c0_43 = arith.constant 0 : index
    %c0_44 = arith.constant 0 : index
    %c0_45 = arith.constant 0 : index
    %118 = vector.load %arg10[%c0_43, %c0_44, %c0_45] : memref<1x64x64xbf16, #tpu.memory_space<vmem>>, vector<1x64x64xbf16>
    %119 = vector.shape_cast %118 : vector<1x64x64xbf16> to vector<64x64xbf16>
    %cst_46 = arith.constant dense<0.000000e+00> : vector<16x64xf32>
    %120 = tpu.matmul %117, %119, %cst_46 {dimension_numbers = #tpu.dot_dimension_numbers<[1], [0], [0], [1], [0, 0, 1, 1], [], []>} : vector<16x64xbf16>, vector<64x64xbf16>, vector<16x64xf32> -> vector<16x64xf32>
    %c0_47 = arith.constant 0 : index
    %c0_48 = arith.constant 0 : index
    %c0_49 = arith.constant 0 : index
    %121 = vector.load %arg11[%c0_47, %c0_48, %c0_49] : memref<1x1x64xf32, #tpu.memory_space<vmem>>, vector<1x1x64xf32>
    %122 = vector.shape_cast %121 : vector<1x1x64xf32> to vector<1x64xf32>
    %123 = vector.broadcast %122 : vector<1x64xf32> to vector<16x64xf32>
    %124 = arith.addf %120, %123 : vector<16x64xf32>
    %cst_50 = arith.constant 5.000000e-01 : f32
    %125 = vector.broadcast %cst_50 : f32 to vector<16x64xf32>
    %126 = arith.mulf %125, %124 : vector<16x64xf32>
    %cst_51 = arith.constant 4.471500e-02 : f32
    %127 = vector.broadcast %cst_51 : f32 to vector<16x64xf32>
    %128 = arith.mulf %127, %124 : vector<16x64xf32>
    %129 = arith.mulf %128, %124 : vector<16x64xf32>
    %130 = arith.mulf %129, %124 : vector<16x64xf32>
    %131 = arith.addf %124, %130 : vector<16x64xf32>
    %cst_52 = arith.constant 0.797884583 : f32
    %132 = vector.broadcast %cst_52 : f32 to vector<16x64xf32>
    %133 = arith.mulf %132, %131 : vector<16x64xf32>
    %134 = math.tanh %133 : vector<16x64xf32>
    %cst_53 = arith.constant 1.000000e+00 : f32
    %135 = vector.broadcast %cst_53 : f32 to vector<16x64xf32>
    %136 = arith.addf %135, %134 : vector<16x64xf32>
    %137 = arith.mulf %126, %136 : vector<16x64xf32>
    %138 = arith.truncf %137 : vector<16x64xf32> to vector<16x64xbf16>
    %c0_54 = arith.constant 0 : index
    %c0_55 = arith.constant 0 : index
    %c0_56 = arith.constant 0 : index
    %139 = vector.load %arg12[%c0_54, %c0_55, %c0_56] : memref<1x64x64xbf16, #tpu.memory_space<vmem>>, vector<1x64x64xbf16>
    %140 = vector.shape_cast %139 : vector<1x64x64xbf16> to vector<64x64xbf16>
    %cst_57 = arith.constant dense<0.000000e+00> : vector<16x64xf32>
    %141 = tpu.matmul %138, %140, %cst_57 {dimension_numbers = #tpu.dot_dimension_numbers<[1], [0], [0], [1], [0, 0, 1, 1], [], []>} : vector<16x64xbf16>, vector<64x64xbf16>, vector<16x64xf32> -> vector<16x64xf32>
    %c0_58 = arith.constant 0 : index
    %c0_59 = arith.constant 0 : index
    %c0_60 = arith.constant 0 : index
    %142 = vector.load %arg13[%c0_58, %c0_59, %c0_60] : memref<1x1x64xf32, #tpu.memory_space<vmem>>, vector<1x1x64xf32>
    %143 = vector.shape_cast %142 : vector<1x1x64xf32> to vector<1x64xf32>
    %144 = vector.broadcast %143 : vector<1x64xf32> to vector<16x64xf32>
    %145 = arith.addf %141, %144 : vector<16x64xf32>
    %146 = arith.addf %116, %145 : vector<16x64xf32>
    %147 = vector.shape_cast %146 : vector<16x64xf32> to vector<2x8x64xf32>
    %c0_61 = arith.constant 0 : index
    %c0_62 = arith.constant 0 : index
    %c0_63 = arith.constant 0 : index
    %148 = vector.load %arg16[%c0_61, %c0_62, %c0_63] : memref<2x8x64xf32, #tpu.memory_space<vmem>>, vector<2x8x64xf32>
    tpu.vector_store %arg16[%c0_61, %c0_62, %c0_63], %147 {strides = array<i32>} : memref<2x8x64xf32, #tpu.memory_space<vmem>>, vector<2x8x64xf32>,
    %c1_i32 = arith.constant 1 : i32
    %149 = arith.cmpi eq, %arg1, %c1_i32 : i32
    %150 = arith.extui %149 : i1 to i32
    %c0_i32_64 = arith.constant 0 : i32
    %151 = arith.cmpi ne, %150, %c0_i32_64 : i32
    scf.if %151 {
      %c0_65 = arith.constant 0 : index
      %c0_66 = arith.constant 0 : index
      %152 = vector.load %arg14[%c0_65, %c0_66] : memref<1x64xf32, #tpu.memory_space<vmem>>, vector<1x64xf32>
      %c0_67 = arith.constant 0 : index
      %c0_68 = arith.constant 0 : index
      %153 = vector.load %arg15[%c0_67, %c0_68] : memref<1x64xf32, #tpu.memory_space<vmem>>, vector<1x64xf32>
      %cst_69 = arith.constant dense<0.000000e+00> : vector<16xf32>
      %154 = vector.multi_reduction <add>, %146, %cst_69 [1] : vector<16x64xf32> to vector<16xf32>
      %155 = vector.shape_cast %154 : vector<16xf32> to vector<16x1xf32>
      %cst_70 = arith.constant 6.400000e+01 : f32
      %156 = vector.broadcast %cst_70 : f32 to vector<16x1xf32>
      %157 = arith.divf %155, %156 : vector<16x1xf32>
      %158 = vector.broadcast %157 : vector<16x1xf32> to vector<16x64xf32>
      %159 = arith.subf %146, %158 : vector<16x64xf32>
      %160 = arith.mulf %159, %159 : vector<16x64xf32>
      %cst_71 = arith.constant dense<0.000000e+00> : vector<16xf32>
      %161 = vector.multi_reduction <add>, %160, %cst_71 [1] : vector<16x64xf32> to vector<16xf32>
      %162 = vector.shape_cast %161 : vector<16xf32> to vector<16x1xf32>
      %cst_72 = arith.constant 6.400000e+01 : f32
      %163 = vector.broadcast %cst_72 : f32 to vector<16x1xf32>
      %164 = arith.divf %162, %163 : vector<16x1xf32>
      %165 = vector.broadcast %157 : vector<16x1xf32> to vector<16x64xf32>
      %166 = arith.subf %146, %165 : vector<16x64xf32>
      %cst_73 = arith.constant 9.99999974E-6 : f32
      %167 = vector.broadcast %cst_73 : f32 to vector<16x1xf32>
      %168 = arith.addf %164, %167 : vector<16x1xf32>
      %169 = math.rsqrt %168 : vector<16x1xf32>
      %170 = vector.broadcast %169 : vector<16x1xf32> to vector<16x64xf32>
      %171 = arith.mulf %166, %170 : vector<16x64xf32>
      %172 = vector.broadcast %152 : vector<1x64xf32> to vector<16x64xf32>
      %173 = arith.mulf %171, %172 : vector<16x64xf32>
      %174 = vector.broadcast %153 : vector<1x64xf32> to vector<16x64xf32>
      %175 = arith.addf %173, %174 : vector<16x64xf32>
      %176 = vector.shape_cast %175 : vector<16x64xf32> to vector<2x8x64xf32>
      %c0_74 = arith.constant 0 : index
      %c0_75 = arith.constant 0 : index
      %c0_76 = arith.constant 0 : index
      %177 = vector.load %arg16[%c0_74, %c0_75, %c0_76] : memref<2x8x64xf32, #tpu.memory_space<vmem>>, vector<2x8x64xf32>
      tpu.vector_store %arg16[%c0_74, %c0_75, %c0_76], %176 {strides = array<i32>} : memref<2x8x64xf32, #tpu.memory_space<vmem>>, vector<2x8x64xf32>,
    } else {
    }
    return
  }
  func.func @transform_0(%arg0: i32, %arg1: i32) -> (i32, i32, i32) {
    %c0_i32 = arith.constant 0 : i32
    %c0_i32_0 = arith.constant 0 : i32
    %c0_i32_1 = arith.constant 0 : i32
    return %arg0, %c0_i32, %c0_i32_0 : i32, i32, i32
  }
  func.func @transform_1(%arg0: i32, %arg1: i32) -> (i32, i32, i32) {
    %c0_i32 = arith.constant 0 : i32
    %c0_i32_0 = arith.constant 0 : i32
    %c0_i32_1 = arith.constant 0 : i32
    return %arg1, %c0_i32, %c0_i32_0 : i32, i32, i32
  }
  func.func @transform_2(%arg0: i32, %arg1: i32) -> (i32, i32, i32) {
    %c0_i32 = arith.constant 0 : i32
    %c0_i32_0 = arith.constant 0 : i32
    %c0_i32_1 = arith.constant 0 : i32
    return %arg1, %c0_i32, %c0_i32_0 : i32, i32, i32
  }
  func.func @transform_3(%arg0: i32, %arg1: i32) -> (i32, i32, i32) {
    %c0_i32 = arith.constant 0 : i32
    %c0_i32_0 = arith.constant 0 : i32
    %c0_i32_1 = arith.constant 0 : i32
    return %arg1, %c0_i32, %c0_i32_0 : i32, i32, i32
  }
  func.func @transform_4(%arg0: i32, %arg1: i32) -> (i32, i32, i32) {
    %c0_i32 = arith.constant 0 : i32
    %c0_i32_0 = arith.constant 0 : i32
    %c0_i32_1 = arith.constant 0 : i32
    return %arg1, %c0_i32, %c0_i32_0 : i32, i32, i32
  }
  func.func @transform_5(%arg0: i32, %arg1: i32) -> (i32, i32, i32) {
    %c0_i32 = arith.constant 0 : i32
    %c0_i32_0 = arith.constant 0 : i32
    %c0_i32_1 = arith.constant 0 : i32
    return %arg1, %c0_i32, %c0_i32_0 : i32, i32, i32
  }
  func.func @transform_6(%arg0: i32, %arg1: i32) -> (i32, i32, i32) {
    %c0_i32 = arith.constant 0 : i32
    %c0_i32_0 = arith.constant 0 : i32
    %c0_i32_1 = arith.constant 0 : i32
    return %arg1, %c0_i32, %c0_i32_0 : i32, i32, i32
  }
  func.func @transform_7(%arg0: i32, %arg1: i32) -> (i32, i32, i32) {
    %c0_i32 = arith.constant 0 : i32
    %c0_i32_0 = arith.constant 0 : i32
    %c0_i32_1 = arith.constant 0 : i32
    return %arg1, %c0_i32, %c0_i32_0 : i32, i32, i32
  }
  func.func @transform_8(%arg0: i32, %arg1: i32) -> (i32, i32, i32) {
    %c0_i32 = arith.constant 0 : i32
    %c0_i32_0 = arith.constant 0 : i32
    %c0_i32_1 = arith.constant 0 : i32
    return %arg1, %c0_i32, %c0_i32_0 : i32, i32, i32
  }
  func.func @transform_9(%arg0: i32, %arg1: i32) -> (i32, i32, i32) {
    %c0_i32 = arith.constant 0 : i32
    %c0_i32_0 = arith.constant 0 : i32
    %c0_i32_1 = arith.constant 0 : i32
    return %arg1, %c0_i32, %c0_i32_0 : i32, i32, i32
  }
  func.func @transform_10(%arg0: i32, %arg1: i32) -> (i32, i32, i32) {
    %c0_i32 = arith.constant 0 : i32
    %c0_i32_0 = arith.constant 0 : i32
    %c0_i32_1 = arith.constant 0 : i32
    return %arg1, %c0_i32, %c0_i32_0 : i32, i32, i32
  }
  func.func @transform_11(%arg0: i32, %arg1: i32) -> (i32, i32, i32) {
    %c0_i32 = arith.constant 0 : i32
    %c0_i32_0 = arith.constant 0 : i32
    %c0_i32_1 = arith.constant 0 : i32
    return %arg1, %c0_i32, %c0_i32_0 : i32, i32, i32
  }
  func.func @transform_12(%arg0: i32, %arg1: i32) -> (i32, i32) {
    %c0_i32 = arith.constant 0 : i32
    %c0_i32_0 = arith.constant 0 : i32
    %c0_i32_1 = arith.constant 0 : i32
    return %c0_i32, %c0_i32_0 : i32, i32
  }
  func.func @transform_13(%arg0: i32, %arg1: i32) -> (i32, i32) {
    %c0_i32 = arith.constant 0 : i32
    %c0_i32_0 = arith.constant 0 : i32
    %c0_i32_1 = arith.constant 0 : i32
    return %c0_i32, %c0_i32_0 : i32, i32
  }
  func.func @transform_14(%arg0: i32, %arg1: i32) -> (i32, i32, i32) {
    %c0_i32 = arith.constant 0 : i32
    %c0_i32_0 = arith.constant 0 : i32
    %c0_i32_1 = arith.constant 0 : i32
    return %arg0, %c0_i32, %c0_i32_0 : i32, i32, i32
  }
}

</mosaic_0001>

<llo_original>
// kernel: tpu_custom_call.1
$region0: #{tpu_custom_call.1}
  #allocation0 [shape = 'u32[]', space=smem, size = 0x4, offset = 0x4, fixed_abs, tag = 'smem constant byte address 0x4 - core index']
  #allocation1 [shape = 'u32[144,128]{1,0:T(1,128)}', space=vmem, size = 0x12000, scoped, tag = 'internal scratch']
  %s0 = inlined_call_operand.hbm [shape: f32[2,8,64], index: 0, kind: input, shape index: {}]
  %s1 = inlined_call_operand.hbm [shape: f32[2,1,64], index: 1, kind: input, shape index: {}]
  %s2 = inlined_call_operand.vmem [shape: f32[2,1,64], index: 2, kind: input, shape index: {}]
  %s3 = inlined_call_operand.hbm [shape: bf16[2,64,192], index: 3, kind: input, shape index: {}]
  %s4 = inlined_call_operand.hbm [shape: bf16[2,64,64], index: 4, kind: input, shape index: {}]
  %s5 = inlined_call_operand.vmem [shape: f32[2,1,64], index: 5, kind: input, shape index: {}]
  %s6 = inlined_call_operand.vmem [shape: f32[2,1,64], index: 6, kind: input, shape index: {}]
  %s7 = inlined_call_operand.vmem [shape: f32[2,1,64], index: 7, kind: input, shape index: {}]
  %s8 = inlined_call_operand.hbm [shape: bf16[2,64,64], index: 8, kind: input, shape index: {}]
  %s9 = inlined_call_operand.vmem [shape: f32[2,1,64], index: 9, kind: input, shape index: {}]
  %s10 = inlined_call_operand.hbm [shape: bf16[2,64,64], index: 10, kind: input, shape index: {}]
  %s11 = inlined_call_operand.vmem [shape: f32[2,1,64], index: 11, kind: input, shape index: {}]
  %s12 = inlined_call_operand.vmem [shape: f32[1,64], index: 12, kind: input, shape index: {}]
  %s13 = inlined_call_operand.vmem [shape: f32[1,64], index: 13, kind: input, shape index: {}]
  %s14 = inlined_call_operand.hbm [shape: f32[2,8,64], index: 14, kind: output, shape index: {}]
  %s15 = sld [smem:[#allocation0]]
  $region121: #{tpu_custom_call.1} parent=0
    _
  %s17 = ssub.s32 1, %s15
  %s18 = scalar_select 0, %s17, %s15
  $region1: #{tpu_custom_call.1} parent=0
    #allocation2 [shape = 'u8[8192]{0}', space=vmem, size = 0x2000, scoped, tag = 'input window, operand 0, single buffered']
    #allocation3 [shape = 's32[2]{0}', space=sflag, size = 0x8, scoped, tag = 'scoped memory for tpu_custom_call.1']
    #allocation4 [shape = 's32[2]{0}', space=sflag, size = 0x8, scoped, tag = 'scoped memory for tpu_custom_call.1']
    #allocation5 [shape = 'u8[1024]{0}', space=vmem, size = 0x400, scoped, tag = 'input window, operand 1']
    #allocation6 [shape = 's32[2]{0}', space=sflag, size = 0x8, scoped, tag = 'scoped memory for tpu_custom_call.1']
    #allocation7 [shape = 'u8[65536]{0}', space=vmem, size = 0x10000, scoped, tag = 'input window, operand 3']
    #allocation8 [shape = 'u8[32768]{0}', space=vmem, size = 0x8000, scoped, tag = 'input window, operand 4']
    #allocation9 [shape = 's32[2]{0}', space=sflag, size = 0x8, scoped, tag = 'scoped memory for tpu_custom_call.1']
    #allocation10 [shape = 'u8[32768]{0}', space=vmem, size = 0x8000, scoped, tag = 'input window, operand 8']
    #allocation11 [shape = 'u8[32768]{0}', space=vmem, size = 0x8000, scoped, tag = 'input window, operand 10']
    #allocation12 [shape = 's32[2]{0}', space=sflag, size = 0x8, scoped, tag = 'scoped memory for tpu_custom_call.1']
    #allocation13 [shape = 'u8[8192]{0}', space=vmem, size = 0x2000, scoped, tag = 'output window, operand 0, single buffered']
    %19 = vsyncpa [#allocation3], 0
    %20 = vsyncpa [#allocation6], 0
    %s21 = scalar_lea.sflag [#allocation6], 1
    %22 = vsyncpa %s21, 0
    %23 = vsyncpa [#allocation9], 0
    %s24 = scalar_lea.sflag [#allocation9], 1
    %25 = vsyncpa %s24, 0
    %26 = vsyncpa [#allocation12], 0
    %s27 = scalar_lea.sflag [#allocation12], 1
    %28 = vsyncpa %s27, 0
    %29 = vsyncpa [#allocation4], 0
    loop: start=0, step=1, limit=4
    $region2: #{tpu_custom_call.1} parent=1 // loop_pre_header
      _
    $region3: #{tpu_custom_call.1} parent=1 // loop_header
      %s31 = sphi 0, %s35
      %p32 = scmp.ge.s32.totalorder %s31, 4
      %s38 = sphi 0, %s50
      %s39 = sphi 0, %s46
      %s40 = sphi 0, %s38
      %s41 = sphi 0, %s39
      %s42 = sphi 0, %s40
      %s43 = sphi 0, %s41
      %s53 = sphi 0, %s55
      %s56 = sphi 0, %s53
      %s57 = sphi 0, %s56
      %s73 = sphi 0, %s57
      %s79 = sphi 0, %s81
      %s82 = sphi 0, %s79
      %s83 = sphi 0, %s82
      %s99 = sphi 0, %s83
      %s105 = sphi 0, %s107
      %s108 = sphi 0, %s105
      %s109 = sphi 0, %s108
      %s125 = sphi 0, %s109
      %s131 = sphi 0, %s133
      %s134 = sphi 0, %s131
      %s135 = sphi 0, %s134
      %s151 = sphi 0, %s135
      %s157 = sphi 0, %s159
      %s160 = sphi 0, %s157
      %s161 = sphi 0, %s160
      %s177 = sphi 0, %s161
      %s183 = sphi 0, %s185
      %s186 = sphi 0, %s183
      %s187 = sphi 0, %s186
      %s203 = sphi 0, %s187
      %s209 = sphi 0, %s211
      %s212 = sphi 0, %s209
      %s213 = sphi 0, %s212
      %s229 = sphi 0, %s213
      %s235 = sphi 0, %s237
      %s238 = sphi 0, %s235
      %s239 = sphi 0, %s238
      %s255 = sphi 0, %s239
      %s261 = sphi 0, %s263
      %s264 = sphi 0, %s261
      %s265 = sphi 0, %s264
      %s281 = sphi 0, %s265
      %s287 = sphi 0, %s289
      %s290 = sphi 0, %s287
      %s291 = sphi 0, %s290
      %s307 = sphi 0, %s291
      %s313 = sphi 0, %s315
      %s316 = sphi 0, %s313
      %s317 = sphi 0, %s316
      %s333 = sphi 0, %s317
      %s339 = sphi 0, %s341
      %s342 = sphi 0, %s339
      %s343 = sphi 0, %s342
      %s359 = sphi 0, %s343
      %s363 = sphi 0, %s363
      %s365 = sphi 0, %s363
      %s366 = sphi 0, %s365
      %s380 = sphi 0, %s366
      %s384 = sphi 0, %s384
      %s386 = sphi 0, %s384
      %s387 = sphi 0, %s386
      %s401 = sphi 0, %s387
      %s407 = sphi 0, %s409
      %s410 = sphi 0, %s407
      %s411 = sphi 0, %s410
      %s427 = sphi 0, %s411
    $region4: #{tpu_custom_call.1} parent=1 // loop_header_branch
      %34 = sbr.rel (%p32) target = $region8
    $region5: #{tpu_custom_call.1} parent=1 // loop_body
      %s36 = ssub.s32 %s31, 1
      %s37 = ssub.s32 %s31, 2
      %s44 = sadd.s32 1, %s39
      %p45 = scmp.ge.s32.totalorder %s44, 2
      %s46 = scalar_select %p45, 0, %s44
      %s47 = sadd.s32 1, %s38
      %s48 = scalar_select %p45, %s47, %s38
      %p49 = scmp.ge.s32.totalorder %s48, 1
      %s50 = scalar_select %p49, 0, %s48
      %s51 = ssub.s32 %s38, %s50
      %p52 = scmp.eq.s32.totalorder %s51, 0
      %s54 = sadd.s32 %s53, 1
      %s55 = scalar_select %p52, %s53, %s54
      %p58 = pneg %p52
      %p59 = scmp.eq.s32.totalorder %s31, 1
      %p60 = por %p58, %p59
      %p61 = scmp.ne.s32.totalorder %s53, %s56
      %p62 = scmp.eq.s32.totalorder %s31, 0
      %p63 = por %p61, %p62
      %p64 = scmp.ne.s32.totalorder %s53, %s56
      %p65 = scmp.eq.s32.totalorder %s36, 1
      %p66 = por %p64, %p65
      %p67 = scmp.ne.s32.totalorder %s56, %s57
      %p68 = scmp.eq.s32.totalorder %s36, 0
      %p69 = por %p67, %p68
      %p70 = scmp.ne.s32.totalorder %s56, %s57
      %p71 = scmp.eq.s32.totalorder %s37, 1
      %p72 = por %p70, %p71
      %p74 = scmp.ne.s32.totalorder %s57, %s73
      %p75 = scmp.eq.s32.totalorder %s37, 0
      %p76 = por %p74, %p75
      %s77 = ssub.s32 %s39, %s46
      %p78 = scmp.eq.s32.totalorder %s77, 0
      %s80 = sadd.s32 %s79, 1
      %s81 = scalar_select %p78, %s79, %s80
      %p84 = pneg %p78
      %p85 = scmp.eq.s32.totalorder %s31, 1
      %p86 = por %p84, %p85
      %p87 = scmp.ne.s32.totalorder %s79, %s82
      %p88 = scmp.eq.s32.totalorder %s31, 0
      %p89 = por %p87, %p88
      %p90 = scmp.ne.s32.totalorder %s79, %s82
      %p91 = scmp.eq.s32.totalorder %s36, 1
      %p92 = por %p90, %p91
      %p93 = scmp.ne.s32.totalorder %s82, %s83
      %p94 = scmp.eq.s32.totalorder %s36, 0
      %p95 = por %p93, %p94
      %p96 = scmp.ne.s32.totalorder %s82, %s83
      %p97 = scmp.eq.s32.totalorder %s37, 1
      %p98 = por %p96, %p97
      %p100 = scmp.ne.s32.totalorder %s83, %s99
      %p101 = scmp.eq.s32.totalorder %s37, 0
      %p102 = por %p100, %p101
      %s103 = ssub.s32 %s39, %s46
      %p104 = scmp.eq.s32.totalorder %s103, 0
      %s106 = sadd.s32 %s105, 1
      %s107 = scalar_select %p104, %s105, %s106
      %p110 = pneg %p104
      %p111 = scmp.eq.s32.totalorder %s31, 1
      %p112 = por %p110, %p111
      %p113 = scmp.ne.s32.totalorder %s105, %s108
      %p114 = scmp.eq.s32.totalorder %s31, 0
      %p115 = por %p113, %p114
      %p116 = scmp.ne.s32.totalorder %s105, %s108
      %p117 = scmp.eq.s32.totalorder %s36, 1
      %p118 = por %p116, %p117
      %p119 = scmp.ne.s32.totalorder %s108, %s109
      %p120 = scmp.eq.s32.totalorder %s36, 0
      %p121 = por %p119, %p120
      %p122 = scmp.ne.s32.totalorder %s108, %s109
      %p123 = scmp.eq.s32.totalorder %s37, 1
      %p124 = por %p122, %p123
      %p126 = scmp.ne.s32.totalorder %s109, %s125
      %p127 = scmp.eq.s32.totalorder %s37, 0
      %p128 = por %p126, %p127
      %s129 = ssub.s32 %s39, %s46
      %p130 = scmp.eq.s32.totalorder %s129, 0
      %s132 = sadd.s32 %s131, 1
      %s133 = scalar_select %p130, %s131, %s132
      %p136 = pneg %p130
      %p137 = scmp.eq.s32.totalorder %s31, 1
      %p138 = por %p136, %p137
      %p139 = scmp.ne.s32.totalorder %s131, %s134
      %p140 = scmp.eq.s32.totalorder %s31, 0
      %p141 = por %p139, %p140
      %p142 = scmp.ne.s32.totalorder %s131, %s134
      %p143 = scmp.eq.s32.totalorder %s36, 1
      %p144 = por %p142, %p143
      %p145 = scmp.ne.s32.totalorder %s134, %s135
      %p146 = scmp.eq.s32.totalorder %s36, 0
      %p147 = por %p145, %p146
      %p148 = scmp.ne.s32.totalorder %s134, %s135
      %p149 = scmp.eq.s32.totalorder %s37, 1
      %p150 = por %p148, %p149
      %p152 = scmp.ne.s32.totalorder %s135, %s151
      %p153 = scmp.eq.s32.totalorder %s37, 0
      %p154 = por %p152, %p153
      %s155 = ssub.s32 %s39, %s46
      %p156 = scmp.eq.s32.totalorder %s155, 0
      %s158 = sadd.s32 %s157, 1
      %s159 = scalar_select %p156, %s157, %s158
      %p162 = pneg %p156
      %p163 = scmp.eq.s32.totalorder %s31, 1
      %p164 = por %p162, %p163
      %p165 = scmp.ne.s32.totalorder %s157, %s160
      %p166 = scmp.eq.s32.totalorder %s31, 0
      %p167 = por %p165, %p166
      %p168 = scmp.ne.s32.totalorder %s157, %s160
      %p169 = scmp.eq.s32.totalorder %s36, 1
      %p170 = por %p168, %p169
      %p171 = scmp.ne.s32.totalorder %s160, %s161
      %p172 = scmp.eq.s32.totalorder %s36, 0
      %p173 = por %p171, %p172
      %p174 = scmp.ne.s32.totalorder %s160, %s161
      %p175 = scmp.eq.s32.totalorder %s37, 1
      %p176 = por %p174, %p175
      %p178 = scmp.ne.s32.totalorder %s161, %s177
      %p179 = scmp.eq.s32.totalorder %s37, 0
      %p180 = por %p178, %p179
      %s181 = ssub.s32 %s39, %s46
      %p182 = scmp.eq.s32.totalorder %s181, 0
      %s184 = sadd.s32 %s183, 1
      %s185 = scalar_select %p182, %s183, %s184
      %p188 = pneg %p182
      %p189 = scmp.eq.s32.totalorder %s31, 1
      %p190 = por %p188, %p189
      %p191 = scmp.ne.s32.totalorder %s183, %s186
      %p192 = scmp.eq.s32.totalorder %s31, 0
      %p193 = por %p191, %p192
      %p194 = scmp.ne.s32.totalorder %s183, %s186
      %p195 = scmp.eq.s32.totalorder %s36, 1
      %p196 = por %p194, %p195
      %p197 = scmp.ne.s32.totalorder %s186, %s187
      %p198 = scmp.eq.s32.totalorder %s36, 0
      %p199 = por %p197, %p198
      %p200 = scmp.ne.s32.totalorder %s186, %s187
      %p201 = scmp.eq.s32.totalorder %s37, 1
      %p202 = por %p200, %p201
      %p204 = scmp.ne.s32.totalorder %s187, %s203
      %p205 = scmp.eq.s32.totalorder %s37, 0
      %p206 = por %p204, %p205
      %s207 = ssub.s32 %s39, %s46
      %p208 = scmp.eq.s32.totalorder %s207, 0
      %s210 = sadd.s32 %s209, 1
      %s211 = scalar_select %p208, %s209, %s210
      %p214 = pneg %p208
      %p215 = scmp.eq.s32.totalorder %s31, 1
      %p216 = por %p214, %p215
      %p217 = scmp.ne.s32.totalorder %s209, %s212
      %p218 = scmp.eq.s32.totalorder %s31, 0
      %p219 = por %p217, %p218
      %p220 = scmp.ne.s32.totalorder %s209, %s212
      %p221 = scmp.eq.s32.totalorder %s36, 1
      %p222 = por %p220, %p221
      %p223 = scmp.ne.s32.totalorder %s212, %s213
      %p224 = scmp.eq.s32.totalorder %s36, 0
      %p225 = por %p223, %p224
      %p226 = scmp.ne.s32.totalorder %s212, %s213
      %p227 = scmp.eq.s32.totalorder %s37, 1
      %p228 = por %p226, %p227
      %p230 = scmp.ne.s32.totalorder %s213, %s229
      %p231 = scmp.eq.s32.totalorder %s37, 0
      %p232 = por %p230, %p231
      %s233 = ssub.s32 %s39, %s46
      %p234 = scmp.eq.s32.totalorder %s233, 0
      %s236 = sadd.s32 %s235, 1
      %s237 = scalar_select %p234, %s235, %s236
      %p240 = pneg %p234
      %p241 = scmp.eq.s32.totalorder %s31, 1
      %p242 = por %p240, %p241
      %p243 = scmp.ne.s32.totalorder %s235, %s238
      %p244 = scmp.eq.s32.totalorder %s31, 0
      %p245 = por %p243, %p244
      %p246 = scmp.ne.s32.totalorder %s235, %s238
      %p247 = scmp.eq.s32.totalorder %s36, 1
      %p248 = por %p246, %p247
      %p249 = scmp.ne.s32.totalorder %s238, %s239
      %p250 = scmp.eq.s32.totalorder %s36, 0
      %p251 = por %p249, %p250
      %p252 = scmp.ne.s32.totalorder %s238, %s239
      %p253 = scmp.eq.s32.totalorder %s37, 1
      %p254 = por %p252, %p253
      %p256 = scmp.ne.s32.totalorder %s239, %s255
      %p257 = scmp.eq.s32.totalorder %s37, 0
      %p258 = por %p256, %p257
      %s259 = ssub.s32 %s39, %s46
      %p260 = scmp.eq.s32.totalorder %s259, 0
      %s262 = sadd.s32 %s261, 1
      %s263 = scalar_select %p260, %s261, %s262
      %p266 = pneg %p260
      %p267 = scmp.eq.s32.totalorder %s31, 1
      %p268 = por %p266, %p267
      %p269 = scmp.ne.s32.totalorder %s261, %s264
      %p270 = scmp.eq.s32.totalorder %s31, 0
      %p271 = por %p269, %p270
      %p272 = scmp.ne.s32.totalorder %s261, %s264
      %p273 = scmp.eq.s32.totalorder %s36, 1
      %p274 = por %p272, %p273
      %p275 = scmp.ne.s32.totalorder %s264, %s265
      %p276 = scmp.eq.s32.totalorder %s36, 0
      %p277 = por %p275, %p276
      %p278 = scmp.ne.s32.totalorder %s264, %s265
      %p279 = scmp.eq.s32.totalorder %s37, 1
      %p280 = por %p278, %p279
      %p282 = scmp.ne.s32.totalorder %s265, %s281
      %p283 = scmp.eq.s32.totalorder %s37, 0
      %p284 = por %p282, %p283
      %s285 = ssub.s32 %s39, %s46
      %p286 = scmp.eq.s32.totalorder %s285, 0
      %s288 = sadd.s32 %s287, 1
      %s289 = scalar_select %p286, %s287, %s288
      %p292 = pneg %p286
      %p293 = scmp.eq.s32.totalorder %s31, 1
      %p294 = por %p292, %p293
      %p295 = scmp.ne.s32.totalorder %s287, %s290
      %p296 = scmp.eq.s32.totalorder %s31, 0
      %p297 = por %p295, %p296
      %p298 = scmp.ne.s32.totalorder %s287, %s290
      %p299 = scmp.eq.s32.totalorder %s36, 1
      %p300 = por %p298, %p299
      %p301 = scmp.ne.s32.totalorder %s290, %s291
      %p302 = scmp.eq.s32.totalorder %s36, 0
      %p303 = por %p301, %p302
      %p304 = scmp.ne.s32.totalorder %s290, %s291
      %p305 = scmp.eq.s32.totalorder %s37, 1
      %p306 = por %p304, %p305
      %p308 = scmp.ne.s32.totalorder %s291, %s307
      %p309 = scmp.eq.s32.totalorder %s37, 0
      %p310 = por %p308, %p309
      %s311 = ssub.s32 %s39, %s46
      %p312 = scmp.eq.s32.totalorder %s311, 0
      %s314 = sadd.s32 %s313, 1
      %s315 = scalar_select %p312, %s313, %s314
      %p318 = pneg %p312
      %p319 = scmp.eq.s32.totalorder %s31, 1
      %p320 = por %p318, %p319
      %p321 = scmp.ne.s32.totalorder %s313, %s316
      %p322 = scmp.eq.s32.totalorder %s31, 0
      %p323 = por %p321, %p322
      %p324 = scmp.ne.s32.totalorder %s313, %s316
      %p325 = scmp.eq.s32.totalorder %s36, 1
      %p326 = por %p324, %p325
      %p327 = scmp.ne.s32.totalorder %s316, %s317
      %p328 = scmp.eq.s32.totalorder %s36, 0
      %p329 = por %p327, %p328
      %p330 = scmp.ne.s32.totalorder %s316, %s317
      %p331 = scmp.eq.s32.totalorder %s37, 1
      %p332 = por %p330, %p331
      %p334 = scmp.ne.s32.totalorder %s317, %s333
      %p335 = scmp.eq.s32.totalorder %s37, 0
      %p336 = por %p334, %p335
      %s337 = ssub.s32 %s39, %s46
      %p338 = scmp.eq.s32.totalorder %s337, 0
      %s340 = sadd.s32 %s339, 1
      %s341 = scalar_select %p338, %s339, %s340
      %p344 = pneg %p338
      %p345 = scmp.eq.s32.totalorder %s31, 1
      %p346 = por %p344, %p345
      %p347 = scmp.ne.s32.totalorder %s339, %s342
      %p348 = scmp.eq.s32.totalorder %s31, 0
      %p349 = por %p347, %p348
      %p350 = scmp.ne.s32.totalorder %s339, %s342
      %p351 = scmp.eq.s32.totalorder %s36, 1
      %p352 = por %p350, %p351
      %p353 = scmp.ne.s32.totalorder %s342, %s343
      %p354 = scmp.eq.s32.totalorder %s36, 0
      %p355 = por %p353, %p354
      %p356 = scmp.ne.s32.totalorder %s342, %s343
      %p357 = scmp.eq.s32.totalorder %s37, 1
      %p358 = por %p356, %p357
      %p360 = scmp.ne.s32.totalorder %s343, %s359
      %p361 = scmp.eq.s32.totalorder %s37, 0
      %p362 = por %p360, %p361
      %s364 = sadd.s32 %s363, 1
      %p367 = scmp.eq.s32.totalorder %s31, 1
      %p368 = scmp.ne.s32.totalorder %s363, %s365
      %p369 = scmp.eq.s32.totalorder %s31, 0
      %p370 = por %p368, %p369
      %p371 = scmp.ne.s32.totalorder %s363, %s365
      %p372 = scmp.eq.s32.totalorder %s36, 1
      %p373 = por %p371, %p372
      %p374 = scmp.ne.s32.totalorder %s365, %s366
      %p375 = scmp.eq.s32.totalorder %s36, 0
      %p376 = por %p374, %p375
      %p377 = scmp.ne.s32.totalorder %s365, %s366
      %p378 = scmp.eq.s32.totalorder %s37, 1
      %p379 = por %p377, %p378
      %p381 = scmp.ne.s32.totalorder %s366, %s380
      %p382 = scmp.eq.s32.totalorder %s37, 0
      %p383 = por %p381, %p382
      %s385 = sadd.s32 %s384, 1
      %p388 = scmp.eq.s32.totalorder %s31, 1
      %p389 = scmp.ne.s32.totalorder %s384, %s386
      %p390 = scmp.eq.s32.totalorder %s31, 0
      %p391 = por %p389, %p390
      %p392 = scmp.ne.s32.totalorder %s384, %s386
      %p393 = scmp.eq.s32.totalorder %s36, 1
      %p394 = por %p392, %p393
      %p395 = scmp.ne.s32.totalorder %s386, %s387
      %p396 = scmp.eq.s32.totalorder %s36, 0
      %p397 = por %p395, %p396
      %p398 = scmp.ne.s32.totalorder %s386, %s387
      %p399 = scmp.eq.s32.totalorder %s37, 1
      %p400 = por %p398, %p399
      %p402 = scmp.ne.s32.totalorder %s387, %s401
      %p403 = scmp.eq.s32.totalorder %s37, 0
      %p404 = por %p402, %p403
      %s405 = ssub.s32 %s38, %s50
      %p406 = scmp.eq.s32.totalorder %s405, 0
      %s408 = sadd.s32 %s407, 1
      %s409 = scalar_select %p406, %s407, %s408
      %p412 = pneg %p406
      %p413 = scmp.eq.s32.totalorder %s31, 1
      %p414 = por %p412, %p413
      %p415 = scmp.ne.s32.totalorder %s407, %s410
      %p416 = scmp.eq.s32.totalorder %s31, 0
      %p417 = por %p415, %p416
      %p418 = scmp.ne.s32.totalorder %s407, %s410
      %p419 = scmp.eq.s32.totalorder %s36, 1
      %p420 = por %p418, %p419
      %p421 = scmp.ne.s32.totalorder %s410, %s411
      %p422 = scmp.eq.s32.totalorder %s36, 0
      %p423 = por %p421, %p422
      %p424 = scmp.ne.s32.totalorder %s410, %s411
      %p425 = scmp.eq.s32.totalorder %s37, 1
      %p426 = por %p424, %p425
      %p428 = scmp.ne.s32.totalorder %s411, %s427
      %p429 = scmp.eq.s32.totalorder %s37, 0
      %p430 = por %p428, %p429
      %p431 = scmp.le.s32.totalorder 1, %s31
      %p432 = scmp.lt.s32.totalorder %s31, 3
      %p433 = pnand %p431, %p432
      %p434 = pneg %p433
      // Predicated region
      $region9: #{tpu_custom_call.1} parent=5 // pred_check
        _
      $region10: #{tpu_custom_call.1} parent=5 // pred_check_branch
        %436 = sbr.rel (%p433) target = $region12
      $region11: #{tpu_custom_call.1} parent=5 // pred_region
        %s437 = ssub.s32 %s31, 1
        // Predicated region
        $region13: #{tpu_custom_call.1} parent=11 // pred_check
          %p438 = pneg %p69
        $region14: #{tpu_custom_call.1} parent=11 // pred_check_branch
          %440 = sbr.rel (%p438) target = $region16
        $region15: #{tpu_custom_call.1} parent=11 // pred_region
          %s441 = smul.u32 2, %s40
          %s443 = ssub.s32 256, 256
          %444 = vsyncadd [#allocation3], %s443
          %s445 = smul.addr %s441, 128
          %s446 = scalar_lea.hbm %s0, %s445
          %s447 = sshll.u32 [#allocation2], 4
          %s448 = int_to_ptr.vmem [resolvable:$true] %s447
          %453 = dma.hbm_to_vmem [thread:$0]  %s446, 256, %s448, [#allocation3], 128, 128, 8
        $region16: #{tpu_custom_call.1} parent=11 // pred_fallthru
          _
        // Predicated region
        $region17: #{tpu_custom_call.1} parent=11 // pred_check
          %p454 = pneg %p376
        $region18: #{tpu_custom_call.1} parent=11 // pred_check_branch
          %456 = sbr.rel (%p454) target = $region20
        $region19: #{tpu_custom_call.1} parent=11 // pred_region
          _
        $region20: #{tpu_custom_call.1} parent=11 // pred_fallthru
          _
        // Predicated region
        $region21: #{tpu_custom_call.1} parent=11 // pred_check
          %p457 = pneg %p397
        $region22: #{tpu_custom_call.1} parent=11 // pred_check_branch
          %459 = sbr.rel (%p457) target = $region24
        $region23: #{tpu_custom_call.1} parent=11 // pred_region
          _
        $region24: #{tpu_custom_call.1} parent=11 // pred_fallthru
          _
      $region12: #{tpu_custom_call.1} parent=5 // pred_fallthru
        _
      %p460 = scmp.lt.s32.totalorder %s31, 2
      // Predicated region
      $region25: #{tpu_custom_call.1} parent=5 // pred_check
        %p461 = pneg %p460
      $region26: #{tpu_custom_call.1} parent=5 // pred_check_branch
        %463 = sbr.rel (%p461) target = $region28
      $region27: #{tpu_custom_call.1} parent=5 // pred_region
        // Predicated region
        $region29: #{tpu_custom_call.1} parent=27 // pred_check
          %p464 = pneg %p89
        $region30: #{tpu_custom_call.1} parent=27 // pred_check_branch
          %466 = sbr.rel (%p464) target = $region32
        $region31: #{tpu_custom_call.1} parent=27 // pred_region
          %s467 = sand.u32 %s31, 1
          %s468 = scalar_lea.sflag [#allocation6], %s467
          %s469 = sand.u32 %s79, 1
          %s470 = scalar_lea.vmem [#allocation5], %s469
          %s472 = ssub.s32 16, 16
          %473 = vsyncadd %s468, %s472
          %s474 = smul.addr %s39, 16
          %s475 = scalar_lea.hbm %s1, %s474
          %s477 = sshll.u32 %s470, 4
          %s478 = int_to_ptr.vmem [resolvable:$true] %s477
          %480 = dma.hbm_to_vmem [thread:$0]  %s475, 16, %s478, %s468
        $region32: #{tpu_custom_call.1} parent=27 // pred_fallthru
          _
        // Predicated region
        $region33: #{tpu_custom_call.1} parent=27 // pred_check
          %p481 = pneg %p115
        $region34: #{tpu_custom_call.1} parent=27 // pred_check_branch
          %483 = sbr.rel (%p481) target = $region36
        $region35: #{tpu_custom_call.1} parent=27 // pred_region
          %p484 = scmp.lt.s32.totalorder %s39, 1
          %s485 = scalar_select %p484, %s39, 1
          %s486 = scalar_lea.vmem %s2, %s485
        $region36: #{tpu_custom_call.1} parent=27 // pred_fallthru
          _
        // Predicated region
        $region37: #{tpu_custom_call.1} parent=27 // pred_check
          %p487 = pneg %p141
        $region38: #{tpu_custom_call.1} parent=27 // pred_check_branch
          %489 = sbr.rel (%p487) target = $region40
        $region39: #{tpu_custom_call.1} parent=27 // pred_region
          %s490 = sand.u32 %s31, 1
          %s491 = scalar_lea.sflag [#allocation6], %s490
          %s492 = sand.u32 %s131, 1
          %s493 = smul.addr %s492, 64
          %s494 = scalar_lea.vmem [#allocation7], %s493
          %s496 = ssub.s32 1024, 1024
          %497 = vsyncadd %s491, %s496
          %s498 = smul.addr %s39, 16
          %s499 = smul.addr %s498, 64
          %s500 = scalar_lea.hbm %s3, %s499
          %s501 = sshll.u32 %s494, 4
          %s502 = int_to_ptr.vmem [resolvable:$true] %s501
          %507 = dma.hbm_to_vmem [thread:$0]  %s500, 1024, %s502, %s491, 128, 128, 8
        $region40: #{tpu_custom_call.1} parent=27 // pred_fallthru
          _
        // Predicated region
        $region41: #{tpu_custom_call.1} parent=27 // pred_check
          %p508 = pneg %p167
        $region42: #{tpu_custom_call.1} parent=27 // pred_check_branch
          %510 = sbr.rel (%p508) target = $region44
        $region43: #{tpu_custom_call.1} parent=27 // pred_region
          %s511 = sand.u32 %s31, 1
          %s512 = scalar_lea.sflag [#allocation9], %s511
          %s513 = sand.u32 %s157, 1
          %s514 = smul.addr %s513, 32
          %s515 = scalar_lea.vmem [#allocation8], %s514
          %s517 = ssub.s32 512, 512
          %518 = vsyncadd %s512, %s517
          %s519 = smul.addr %s39, 8
          %s520 = smul.addr %s519, 64
          %s521 = scalar_lea.hbm %s4, %s520
          %s522 = sshll.u32 %s515, 4
          %s523 = int_to_ptr.vmem [resolvable:$true] %s522
          %528 = dma.hbm_to_vmem [thread:$0]  %s521, 512, %s523, %s512, 64, 64, 4
        $region44: #{tpu_custom_call.1} parent=27 // pred_fallthru
          _
        // Predicated region
        $region45: #{tpu_custom_call.1} parent=27 // pred_check
          %p529 = pneg %p193
        $region46: #{tpu_custom_call.1} parent=27 // pred_check_branch
          %531 = sbr.rel (%p529) target = $region48
        $region47: #{tpu_custom_call.1} parent=27 // pred_region
          %p532 = scmp.lt.s32.totalorder %s39, 1
          %s533 = scalar_select %p532, %s39, 1
          %s534 = scalar_lea.vmem %s5, %s533
        $region48: #{tpu_custom_call.1} parent=27 // pred_fallthru
          _
        // Predicated region
        $region49: #{tpu_custom_call.1} parent=27 // pred_check
          %p535 = pneg %p219
        $region50: #{tpu_custom_call.1} parent=27 // pred_check_branch
          %537 = sbr.rel (%p535) target = $region52
        $region51: #{tpu_custom_call.1} parent=27 // pred_region
          %p538 = scmp.lt.s32.totalorder %s39, 1
          %s539 = scalar_select %p538, %s39, 1
          %s540 = scalar_lea.vmem %s6, %s539
        $region52: #{tpu_custom_call.1} parent=27 // pred_fallthru
          _
        // Predicated region
        $region53: #{tpu_custom_call.1} parent=27 // pred_check
          %p541 = pneg %p245
        $region54: #{tpu_custom_call.1} parent=27 // pred_check_branch
          %543 = sbr.rel (%p541) target = $region56
        $region55: #{tpu_custom_call.1} parent=27 // pred_region
          %p544 = scmp.lt.s32.totalorder %s39, 1
          %s545 = scalar_select %p544, %s39, 1
          %s546 = scalar_lea.vmem %s7, %s545
        $region56: #{tpu_custom_call.1} parent=27 // pred_fallthru
          _
        // Predicated region
        $region57: #{tpu_custom_call.1} parent=27 // pred_check
          %p547 = pneg %p271
        $region58: #{tpu_custom_call.1} parent=27 // pred_check_branch
          %549 = sbr.rel (%p547) target = $region60
        $region59: #{tpu_custom_call.1} parent=27 // pred_region
          %s550 = sand.u32 %s31, 1
          %s551 = scalar_lea.sflag [#allocation9], %s550
          %s552 = sand.u32 %s261, 1
          %s553 = smul.addr %s552, 32
          %s554 = scalar_lea.vmem [#allocation10], %s553
          %s556 = ssub.s32 512, 512
          %557 = vsyncadd %s551, %s556
          %s558 = smul.addr %s39, 8
          %s559 = smul.addr %s558, 64
          %s560 = scalar_lea.hbm %s8, %s559
          %s561 = sshll.u32 %s554, 4
          %s562 = int_to_ptr.vmem [resolvable:$true] %s561
          %567 = dma.hbm_to_vmem [thread:$0]  %s560, 512, %s562, %s551, 64, 64, 4
        $region60: #{tpu_custom_call.1} parent=27 // pred_fallthru
          _
        // Predicated region
        $region61: #{tpu_custom_call.1} parent=27 // pred_check
          %p568 = pneg %p297
        $region62: #{tpu_custom_call.1} parent=27 // pred_check_branch
          %570 = sbr.rel (%p568) target = $region64
        $region63: #{tpu_custom_call.1} parent=27 // pred_region
          %p571 = scmp.lt.s32.totalorder %s39, 1
          %s572 = scalar_select %p571, %s39, 1
          %s573 = scalar_lea.vmem %s9, %s572
        $region64: #{tpu_custom_call.1} parent=27 // pred_fallthru
          _
        // Predicated region
        $region65: #{tpu_custom_call.1} parent=27 // pred_check
          %p574 = pneg %p323
        $region66: #{tpu_custom_call.1} parent=27 // pred_check_branch
          %576 = sbr.rel (%p574) target = $region68
        $region67: #{tpu_custom_call.1} parent=27 // pred_region
          %s577 = sand.u32 %s313, 1
          %s578 = scalar_lea.sflag [#allocation12], %s577
          %s579 = sand.u32 %s313, 1
          %s580 = smul.addr %s579, 32
          %s581 = scalar_lea.vmem [#allocation11], %s580
          %s583 = ssub.s32 512, 512
          %584 = vsyncadd %s578, %s583
          %s585 = smul.addr %s39, 8
          %s586 = smul.addr %s585, 64
          %s587 = scalar_lea.hbm %s10, %s586
          %s588 = sshll.u32 %s581, 4
          %s589 = int_to_ptr.vmem [resolvable:$true] %s588
          %594 = dma.hbm_to_vmem [thread:$0]  %s587, 512, %s589, %s578, 64, 64, 4
        $region68: #{tpu_custom_call.1} parent=27 // pred_fallthru
          _
        // Predicated region
        $region69: #{tpu_custom_call.1} parent=27 // pred_check
          %p595 = pneg %p349
        $region70: #{tpu_custom_call.1} parent=27 // pred_check_branch
          %597 = sbr.rel (%p595) target = $region72
        $region71: #{tpu_custom_call.1} parent=27 // pred_region
          %p598 = scmp.lt.s32.totalorder %s39, 1
          %s599 = scalar_select %p598, %s39, 1
          %s600 = scalar_lea.vmem %s11, %s599
        $region72: #{tpu_custom_call.1} parent=27 // pred_fallthru
          _
      $region28: #{tpu_custom_call.1} parent=5 // pred_fallthru
        _
      %p601 = scmp.le.s32.totalorder 1, %s31
      %p602 = scmp.lt.s32.totalorder %s31, 3
      %p603 = pnand %p601, %p602
      %p604 = pneg %p603
      // Predicated region
      $region73: #{tpu_custom_call.1} parent=5 // pred_check
        _
      $region74: #{tpu_custom_call.1} parent=5 // pred_check_branch
        %606 = sbr.rel (%p603) target = $region76
      $region75: #{tpu_custom_call.1} parent=5 // pred_region
        %s607 = ssub.s32 %s31, 1
        // Predicated region
        $region77: #{tpu_custom_call.1} parent=75 // pred_check
          %p608 = pneg %p69
        $region78: #{tpu_custom_call.1} parent=75 // pred_check_branch
          %610 = sbr.rel (%p608) target = $region80
        $region79: #{tpu_custom_call.1} parent=75 // pred_region
          %611 = dma.done [#allocation3], 256
        $region80: #{tpu_custom_call.1} parent=75 // pred_fallthru
          _
        %s612 = sand.u32 %s36, 1
        %s613 = scalar_lea.sflag [#allocation6], %s612
        %s614 = sand.u32 %s82, 1
        %s615 = scalar_lea.vmem [#allocation5], %s614
        // Predicated region
        $region81: #{tpu_custom_call.1} parent=75 // pred_check
          %p616 = pneg %p95
        $region82: #{tpu_custom_call.1} parent=75 // pred_check_branch
          %618 = sbr.rel (%p616) target = $region84
        $region83: #{tpu_custom_call.1} parent=75 // pred_region
          %619 = dma.done %s613, 16
        $region84: #{tpu_custom_call.1} parent=75 // pred_fallthru
          _
        %s620 = sand.u32 %s36, 1
        %s621 = scalar_lea.sflag [#allocation6], %s620
        %s622 = sand.u32 %s134, 1
        %s623 = smul.addr %s622, 64
        %s624 = scalar_lea.vmem [#allocation7], %s623
        // Predicated region
        $region85: #{tpu_custom_call.1} parent=75 // pred_check
          %p625 = pneg %p147
        $region86: #{tpu_custom_call.1} parent=75 // pred_check_branch
          %627 = sbr.rel (%p625) target = $region88
        $region87: #{tpu_custom_call.1} parent=75 // pred_region
          %628 = dma.done %s621, 1024
        $region88: #{tpu_custom_call.1} parent=75 // pred_fallthru
          _
        %s629 = sand.u32 %s36, 1
        %s630 = scalar_lea.sflag [#allocation9], %s629
        %s631 = sand.u32 %s160, 1
        %s632 = smul.addr %s631, 32
        %s633 = scalar_lea.vmem [#allocation8], %s632
        // Predicated region
        $region89: #{tpu_custom_call.1} parent=75 // pred_check
          %p634 = pneg %p173
        $region90: #{tpu_custom_call.1} parent=75 // pred_check_branch
          %636 = sbr.rel (%p634) target = $region92
        $region91: #{tpu_custom_call.1} parent=75 // pred_region
          %637 = dma.done %s630, 512
        $region92: #{tpu_custom_call.1} parent=75 // pred_fallthru
          _
        %s638 = sand.u32 %s36, 1
        %s639 = scalar_lea.sflag [#allocation9], %s638
        %s640 = sand.u32 %s264, 1
        %s641 = smul.addr %s640, 32
        %s642 = scalar_lea.vmem [#allocation10], %s641
        // Predicated region
        $region93: #{tpu_custom_call.1} parent=75 // pred_check
          %p643 = pneg %p277
        $region94: #{tpu_custom_call.1} parent=75 // pred_check_branch
          %645 = sbr.rel (%p643) target = $region96
        $region95: #{tpu_custom_call.1} parent=75 // pred_region
          %646 = dma.done %s639, 512
        $region96: #{tpu_custom_call.1} parent=75 // pred_fallthru
          _
        %s647 = sand.u32 %s316, 1
        %s648 = scalar_lea.sflag [#allocation12], %s647
        %s649 = sand.u32 %s316, 1
        %s650 = smul.addr %s649, 32
        %s651 = scalar_lea.vmem [#allocation11], %s650
        // Predicated region
        $region97: #{tpu_custom_call.1} parent=75 // pred_check
          %p652 = pneg %p329
        $region98: #{tpu_custom_call.1} parent=75 // pred_check_branch
          %654 = sbr.rel (%p652) target = $region100
        $region99: #{tpu_custom_call.1} parent=75 // pred_region
          %655 = dma.done %s648, 512
        $region100: #{tpu_custom_call.1} parent=75 // pred_fallthru
          _
        %p656 = pneg %p69
        %p657 = pneg %p66
        %s658 = sand.u32 %s36, 1
        %s659 = scalar_lea.sflag [#allocation6], %s658
        %s660 = sand.u32 %s82, 1
        %s661 = scalar_lea.vmem [#allocation5], %s660
        %p662 = pneg %p95
        %p663 = pneg %p92
        %p664 = scmp.lt.s32.totalorder %s41, 1
        %s665 = scalar_select %p664, %s41, 1
        %s666 = scalar_lea.vmem %s2, %s665
        %p667 = pneg %p121
        %p668 = pneg %p118
        %s669 = sand.u32 %s36, 1
        %s670 = scalar_lea.sflag [#allocation6], %s669
        %s671 = sand.u32 %s134, 1
        %s672 = smul.addr %s671, 64
        %s673 = scalar_lea.vmem [#allocation7], %s672
        %p674 = pneg %p147
        %p675 = pneg %p144
        %s676 = sand.u32 %s36, 1
        %s677 = scalar_lea.sflag [#allocation9], %s676
        %s678 = sand.u32 %s160, 1
        %s679 = smul.addr %s678, 32
        %s680 = scalar_lea.vmem [#allocation8], %s679
        %p681 = pneg %p173
        %p682 = pneg %p170
        %p683 = scmp.lt.s32.totalorder %s41, 1
        %s684 = scalar_select %p683, %s41, 1
        %s685 = scalar_lea.vmem %s5, %s684
        %p686 = pneg %p199
        %p687 = pneg %p196
        %p688 = scmp.lt.s32.totalorder %s41, 1
        %s689 = scalar_select %p688, %s41, 1
        %s690 = scalar_lea.vmem %s6, %s689
        %p691 = pneg %p225
        %p692 = pneg %p222
        %p693 = scmp.lt.s32.totalorder %s41, 1
        %s694 = scalar_select %p693, %s41, 1
        %s695 = scalar_lea.vmem %s7, %s694
        %p696 = pneg %p251
        %p697 = pneg %p248
        %s698 = sand.u32 %s36, 1
        %s699 = scalar_lea.sflag [#allocation9], %s698
        %s700 = sand.u32 %s264, 1
        %s701 = smul.addr %s700, 32
        %s702 = scalar_lea.vmem [#allocation10], %s701
        %p703 = pneg %p277
        %p704 = pneg %p274
        %p705 = scmp.lt.s32.totalorder %s41, 1
        %s706 = scalar_select %p705, %s41, 1
        %s707 = scalar_lea.vmem %s9, %s706
        %p708 = pneg %p303
        %p709 = pneg %p300
        %s710 = sand.u32 %s316, 1
        %s711 = scalar_lea.sflag [#allocation12], %s710
        %s712 = sand.u32 %s316, 1
        %s713 = smul.addr %s712, 32
        %s714 = scalar_lea.vmem [#allocation11], %s713
        %p715 = pneg %p329
        %p716 = pneg %p326
        %p717 = scmp.lt.s32.totalorder %s41, 1
        %s718 = scalar_select %p717, %s41, 1
        %s719 = scalar_lea.vmem %s11, %s718
        %p720 = pneg %p355
        %p721 = pneg %p352
        %p722 = pneg %p376
        %p723 = pneg %p373
        %p724 = pneg %p397
        %p725 = pneg %p394
        %p726 = pneg %p423
        %p727 = pneg %p420
        %s728 = smul.u32 2, %s40
        %p729 = scmp.lt.s32.totalorder %s41, 1
        %s730 = scalar_select %p729, %s41, 1
        %s731 = scalar_lea.vmem %s2, %s730
        %p732 = scmp.lt.s32.totalorder %s41, 1
        %s733 = scalar_select %p732, %s41, 1
        %s734 = scalar_lea.vmem %s5, %s733
        %p735 = scmp.lt.s32.totalorder %s41, 1
        %s736 = scalar_select %p735, %s41, 1
        %s737 = scalar_lea.vmem %s6, %s736
        %p738 = scmp.lt.s32.totalorder %s41, 1
        %s739 = scalar_select %p738, %s41, 1
        %s740 = scalar_lea.vmem %s7, %s739
        %p741 = scmp.lt.s32.totalorder %s41, 1
        %s742 = scalar_select %p741, %s41, 1
        %s743 = scalar_lea.vmem %s9, %s742
        %p744 = scmp.lt.s32.totalorder %s41, 1
        %s745 = scalar_select %p744, %s41, 1
        %s746 = scalar_lea.vmem %s11, %s745
        %s747 = smul.u32 2, %s40
        %p749 = scmp.eq.s32.totalorder %s41, 0
        // Predicated region
        $region101: #{tpu_custom_call.1} parent=75 // pred_check
          %p750 = pneg %p749
        $region102: #{tpu_custom_call.1} parent=75 // pred_check_branch
          %752 = sbr.rel (%p750) target = $region104
        $region103: #{tpu_custom_call.1} parent=75 // pred_region
          %v753 = vld [vmem:[#allocation2] sm:$0xff]
          %v754 = vld [vmem:[#allocation2 + $0x8] sm:$0xff]
          %vm755 = vcmask 523264
          %756 = vst.msk [vmem:[#allocation13] sm:$0xff] %vm755, %v753
          %757 = vst.msk [vmem:[#allocation13 + $0x8] sm:$0xff] %vm755, %v754
        $region104: #{tpu_custom_call.1} parent=75 // pred_fallthru
          _
        %v758 = vld [vmem:[#allocation13] sm:$0xff]
        %v759 = vld [vmem:[#allocation13 + $0x8] sm:$0xff]
        %v760 = vld [vmem:[%s615] sm:$0x1]
        %v761 = vld [vmem:[%s731] sm:$0x1]
        %vm762 = vcmask 523264
        %v763 = vsel %vm762, %v758, 0.0
        %764 = vadd.xlane.f32.xlu0 %v763
        %v765 = vpop.xlane.xlu0 %764
        %v766 = vsel %vm762, %v759, 0.0
        %767 = vadd.xlane.f32.xlu0 %v766
        %v768 = vpop.xlane.xlu0 %767
        %v769 = vrcp.pop 64.0
        %v770 = vmul.f32 %v765, %v769
        %v771 = vmul.f32 %v768, %v769
        %v772 = vsub.f32 %v758, %v770
        %v773 = vsub.f32 %v759, %v771
        %v774 = vmul.f32 %v772, %v772
        %v775 = vmul.f32 %v773, %v773
        %v776 = vsel %vm762, %v774, 0.0
        %777 = vadd.xlane.f32.xlu0 %v776
        %v778 = vpop.xlane.xlu0 %777
        %v779 = vsel %vm762, %v775, 0.0
        %780 = vadd.xlane.f32.xlu0 %v779
        %v781 = vpop.xlane.xlu0 %780
        %v782 = vmul.f32 %v778, %v769
        %v783 = vmul.f32 %v781, %v769
        %v784 = vadd.f32 %v782, 1e-05
        %v785 = vadd.f32 %v783, 1e-05
        %v786 = vrsqrt.pop %v784
        %v787 = vrsqrt.pop %v785
        %v788 = vmul.f32 %v772, %v786
        %v789 = vmul.f32 %v773, %v787
        %v791 = vlaneseq
        %v792 = vshrl.u32 %v791, 7
        %v793 = vsub.s32 0, %v792
        %v794 = vrot.slane %v760, %v793
        %v796 = vmul.f32 %v788, %v794
        %v797 = vmul.f32 %v789, %v794
        %v799 = vlaneseq
        %v800 = vshrl.u32 %v799, 7
        %v801 = vsub.s32 0, %v800
        %v802 = vrot.slane %v761, %v801
        %v804 = vadd.f32 %v796, %v802
        %v805 = vadd.f32 %v797, %v802
        %v806 = vpack.c.bf16 %v805, %v804
        %v807 = vld [vmem:[%s624] sm:$0xff]
        %v808 = vld [vmem:[%s624 + $0x8] sm:$0xff]
        %v809 = vld [vmem:[%s624 + $0x10] sm:$0xff]
        %v810 = vld [vmem:[%s624 + $0x18] sm:$0xff]
        %v811 = vld [vmem:[%s624 + $0x20] sm:$0xff]
        %v812 = vld [vmem:[%s624 + $0x28] sm:$0xff]
        %v813 = vld [vmem:[%s624 + $0x30] sm:$0xff]
        %v814 = vld [vmem:[%s624 + $0x38] sm:$0xff]
        %v823 = vunpack.c.l.b16 %v807
        %v824 = vunpack.c.h.b16 %v807
        %v825 = vunpack.c.l.b16 %v808
        %v826 = vunpack.c.h.b16 %v808
        %v827 = vunpack.c.l.b16 %v809
        %v828 = vunpack.c.h.b16 %v809
        %v829 = vunpack.c.l.b16 %v810
        %v830 = vunpack.c.h.b16 %v810
        %v831 = vunpack.c.l.b16 %v811
        %v832 = vunpack.c.h.b16 %v811
        %v833 = vunpack.c.l.b16 %v812
        %v834 = vunpack.c.h.b16 %v812
        %v835 = vunpack.c.l.b16 %v813
        %v836 = vunpack.c.h.b16 %v813
        %v837 = vunpack.c.l.b16 %v814
        %v838 = vunpack.c.h.b16 %v814
        %v839 = vpack.c.b16 %v825, %v823
        %v840 = vpack.c.b16 %v826, %v824
        %v841 = vpack.c.b16 %v829, %v827
        %v842 = vpack.c.b16 %v830, %v828
        %v843 = vpack.c.b16 %v833, %v831
        %v844 = vpack.c.b16 %v834, %v832
        %v845 = vpack.c.b16 %v837, %v835
        %v846 = vpack.c.b16 %v838, %v836
        %v856 = vsel %vm762, %v806, 0
        %858 = vmatprep.subr.bf16.mxu0 0
        %859 = vmatpush1.bf16.msra.mxu0 0
        %860 = vmatprep.subr.bf16.mxu0 0
        %861 = vmatpush1.bf16.msra.mxu0 0
        %862 = vmatprep.subr.bf16.mxu0 0
        %863 = vmatpush1.bf16.msra.mxu0 0
        %864 = vmatprep.subr.bf16.mxu0 0
        %865 = vmatpush1.bf16.msra.mxu0 0
        %866 = vmatprep.subr.bf16.mxu0 %v846
        %867 = vmatpush1.bf16.msra.mxu0 %v845
        %868 = vmatprep.subr.bf16.mxu0 %v844
        %869 = vmatpush1.bf16.msra.mxu0 %v843
        %870 = vmatprep.subr.bf16.mxu0 %v842
        %871 = vmatpush1.bf16.msra.mxu0 %v841
        %872 = vmatprep.subr.bf16.mxu0 %v840
        %873 = vmatpush1.bf16.msra.mxu0 %v839
        %874 = vmatprep.subr.bf16.mxu0 0
        %875 = vmatpush2.bf16.msra.mxu0 0
        %876 = vmatprep.subr.bf16.mxu0 0
        %877 = vmatpush2.bf16.msra.mxu0 0
        %878 = vmatprep.subr.bf16.mxu0 0
        %879 = vmatpush2.bf16.msra.mxu0 0
        %880 = vmatprep.subr.bf16.mxu0 0
        %881 = vmatpush2.bf16.msra.mxu0 0
        %882 = vmatprep.subr.bf16.mxu0 0
        %883 = vmatpush2.bf16.msra.mxu0 0
        %884 = vmatprep.subr.bf16.mxu0 0
        %885 = vmatpush2.bf16.msra.mxu0 0
        %886 = vmatprep.subr.bf16.mxu0 0
        %887 = vmatpush2.bf16.msra.mxu0 0
        %888 = vmatprep.subr.bf16.mxu0 0
        %889 = vmatpush2.bf16.msra.mxu0 0
        %890 = vmatprep.mubr.bf16.mxu0 0
        %891 = vmatmul.mubr.bf16.gmra.mxu0 %v856
        %v892 = vpop.f32.mrf.mxu0
        %v893 = vadd.f32 0.0, %v892
        %v894 = vpop.f32.mrf.mxu0
        %v895 = vadd.f32 0.0, %v894
        %v896 = vpop.f32.mrf.mxu0
        %v897 = vadd.f32 0.0, %v896
        %v898 = vpop.f32.mrf.mxu0
        %v899 = vadd.f32 0.0, %v898
        %900 = vdwg.mxu0
        %v901 = vpack.c.bf16 %v893, %v893
        %v902 = vpack.c.bf16 %v897, %v897
        %v903 = vpack.c.bf16 %v895, %v895
        %v904 = vpack.c.bf16 %v899, %v899
        %906 = vrot.lane.b32.xlu0 %v901, 64
        %v907 = vpop.permute.xlu0 %906
        %vm908 = vcmask 261120
        %v910 = vsel %vm908, %v901, 0
        %v913 = vsel %vm908, %v907, 0
        %915 = vmatprep.subr.bf16.mxu0 0
        %916 = vmatpush1.bf16.xpose.msra.mxu0 0
        %917 = vmatprep.subr.bf16.mxu0 0
        %918 = vmatpush1.bf16.xpose.msra.mxu0 0
        %919 = vmatprep.subr.bf16.mxu0 0
        %920 = vmatpush1.bf16.xpose.msra.mxu0 0
        %921 = vmatprep.subr.bf16.mxu0 0
        %922 = vmatpush1.bf16.xpose.msra.mxu0 0
        %923 = vmatprep.subr.bf16.mxu0 0
        %924 = vmatpush1.bf16.xpose.msra.mxu0 0
        %925 = vmatprep.subr.bf16.mxu0 0
        %926 = vmatpush1.bf16.xpose.msra.mxu0 0
        %927 = vmatprep.subr.bf16.mxu0 0
        %928 = vmatpush1.bf16.xpose.msra.mxu0 0
        %929 = vmatprep.subr.bf16.mxu0 0
        %930 = vmatpush1.bf16.xpose.msra.mxu0 %v913
        %931 = vmatprep.subr.bf16.mxu0 0
        %932 = vmatpush2.bf16.xpose.msra.mxu0 0
        %933 = vmatprep.subr.bf16.mxu0 0
        %934 = vmatpush2.bf16.xpose.msra.mxu0 0
        %935 = vmatprep.subr.bf16.mxu0 0
        %936 = vmatpush2.bf16.xpose.msra.mxu0 0
        %937 = vmatprep.subr.bf16.mxu0 0
        %938 = vmatpush2.bf16.xpose.msra.mxu0 0
        %939 = vmatprep.subr.bf16.mxu0 0
        %940 = vmatpush2.bf16.xpose.msra.mxu0 0
        %941 = vmatprep.subr.bf16.mxu0 0
        %942 = vmatpush2.bf16.xpose.msra.mxu0 0
        %943 = vmatprep.subr.bf16.mxu0 0
        %944 = vmatpush2.bf16.xpose.msra.mxu0 0
        %945 = vmatprep.subr.bf16.mxu0 0
        %946 = vmatpush2.bf16.xpose.msra.mxu0 0
        %947 = vmatprep.mubr.bf16.mxu0 0
        %948 = vmatmul.mubr.bf16.gmra.mxu0 %v910
        %v949 = vpop.f32.mrf.mxu0
        %v950 = vadd.f32 0.0, %v949
        %v951 = vpop.f32.mrf.mxu0
        %v952 = vpop.f32.mrf.mxu0
        %v953 = vpop.f32.mrf.mxu0
        %954 = vdwg.mxu0
        %956 = vrot.lane.b32.xlu0 %v902, 64
        %v957 = vpop.permute.xlu0 %956
        %v959 = vsel %vm908, %v902, 0
        %v962 = vsel %vm908, %v957, 0
        %964 = vmatprep.subr.bf16.mxu0 0
        %965 = vmatpush1.bf16.xpose.msra.mxu0 0
        %966 = vmatprep.subr.bf16.mxu0 0
        %967 = vmatpush1.bf16.xpose.msra.mxu0 0
        %968 = vmatprep.subr.bf16.mxu0 0
        %969 = vmatpush1.bf16.xpose.msra.mxu0 0
        %970 = vmatprep.subr.bf16.mxu0 0
        %971 = vmatpush1.bf16.xpose.msra.mxu0 0
        %972 = vmatprep.subr.bf16.mxu0 0
        %973 = vmatpush1.bf16.xpose.msra.mxu0 0
        %974 = vmatprep.subr.bf16.mxu0 0
        %975 = vmatpush1.bf16.xpose.msra.mxu0 0
        %976 = vmatprep.subr.bf16.mxu0 0
        %977 = vmatpush1.bf16.xpose.msra.mxu0 0
        %978 = vmatprep.subr.bf16.mxu0 0
        %979 = vmatpush1.bf16.xpose.msra.mxu0 %v962
        %980 = vmatprep.subr.bf16.mxu0 0
        %981 = vmatpush2.bf16.xpose.msra.mxu0 0
        %982 = vmatprep.subr.bf16.mxu0 0
        %983 = vmatpush2.bf16.xpose.msra.mxu0 0
        %984 = vmatprep.subr.bf16.mxu0 0
        %985 = vmatpush2.bf16.xpose.msra.mxu0 0
        %986 = vmatprep.subr.bf16.mxu0 0
        %987 = vmatpush2.bf16.xpose.msra.mxu0 0
        %988 = vmatprep.subr.bf16.mxu0 0
        %989 = vmatpush2.bf16.xpose.msra.mxu0 0
        %990 = vmatprep.subr.bf16.mxu0 0
        %991 = vmatpush2.bf16.xpose.msra.mxu0 0
        %992 = vmatprep.subr.bf16.mxu0 0
        %993 = vmatpush2.bf16.xpose.msra.mxu0 0
        %994 = vmatprep.subr.bf16.mxu0 0
        %995 = vmatpush2.bf16.xpose.msra.mxu0 0
        %996 = vmatprep.mubr.bf16.mxu0 0
        %997 = vmatmul.mubr.bf16.gmra.mxu0 %v959
        %v998 = vpop.f32.mrf.mxu0
        %v999 = vadd.f32 0.0, %v998
        %v1000 = vpop.f32.mrf.mxu0
        %v1001 = vpop.f32.mrf.mxu0
        %v1002 = vpop.f32.mrf.mxu0
        %1003 = vdwg.mxu0
        %vm1004 = vcmask 64512
        %v1005 = vsel %vm1004, %v950, -inf
        %1006 = vmax.xlane.f32.xlu0 %v1005
        %v1007 = vpop.xlane.xlu0 %1006
        %v1008 = vsel %vm1004, %v999, -inf
        %1009 = vmax.xlane.f32.xlu0 %v1008
        %v1010 = vpop.xlane.xlu0 %1009
        %v1011 = vsub.f32 %v950, %v1007
        %v1012 = vsub.f32 %v999, %v1010
        %v1013 = vmul.f32 %v1011, 1.442695
        %v1014 = vpow.pop %v1013
        %v1015 = vmul.f32 %v1012, 1.442695
        %v1016 = vpow.pop %v1015
        %v1017 = vsel %vm1004, %v1014, 0.0
        %1018 = vadd.xlane.f32.xlu0 %v1017
        %v1019 = vpop.xlane.xlu0 %1018
        %v1020 = vsel %vm1004, %v1016, 0.0
        %1021 = vadd.xlane.f32.xlu0 %v1020
        %v1022 = vpop.xlane.xlu0 %1021
        %v1023 = vrcp.pop %v1019
        %v1024 = vrcp.pop %v1022
        %v1025 = vmul.f32 %v1014, %v1023
        %v1026 = vmul.f32 %v1016, %v1024
        %v1027 = vpack.c.bf16 %v1025, %v1025
        %v1028 = vpack.c.bf16 %v1026, %v1026
        %v1030 = vsel %vm1004, %v1027, 0
        %vm1032 = vcmask 1043456
        %v1034 = vsel %vm1032, %v903, 0
        %1036 = vmatprep.subr.bf16.mxu0 0
        %1037 = vmatpush1.bf16.msra.mxu0 0
        %1038 = vmatprep.subr.bf16.mxu0 0
        %1039 = vmatpush1.bf16.msra.mxu0 0
        %1040 = vmatprep.subr.bf16.mxu0 0
        %1041 = vmatpush1.bf16.msra.mxu0 0
        %1042 = vmatprep.subr.bf16.mxu0 0
        %1043 = vmatpush1.bf16.msra.mxu0 0
        %1044 = vmatprep.subr.bf16.mxu0 0
        %1045 = vmatpush1.bf16.msra.mxu0 0
        %1046 = vmatprep.subr.bf16.mxu0 0
        %1047 = vmatpush1.bf16.msra.mxu0 0
        %1048 = vmatprep.subr.bf16.mxu0 0
        %1049 = vmatpush1.bf16.msra.mxu0 0
        %1050 = vmatprep.subr.bf16.mxu0 0
        %1051 = vmatpush1.bf16.msra.mxu0 %v1034
        %1052 = vmatprep.subr.bf16.mxu0 0
        %1053 = vmatpush2.bf16.msra.mxu0 0
        %1054 = vmatprep.subr.bf16.mxu0 0
        %1055 = vmatpush2.bf16.msra.mxu0 0
        %1056 = vmatprep.subr.bf16.mxu0 0
        %1057 = vmatpush2.bf16.msra.mxu0 0
        %1058 = vmatprep.subr.bf16.mxu0 0
        %1059 = vmatpush2.bf16.msra.mxu0 0
        %1060 = vmatprep.subr.bf16.mxu0 0
        %1061 = vmatpush2.bf16.msra.mxu0 0
        %1062 = vmatprep.subr.bf16.mxu0 0
        %1063 = vmatpush2.bf16.msra.mxu0 0
        %1064 = vmatprep.subr.bf16.mxu0 0
        %1065 = vmatpush2.bf16.msra.mxu0 0
        %1066 = vmatprep.subr.bf16.mxu0 0
        %1067 = vmatpush2.bf16.msra.mxu0 0
        %1068 = vmatprep.mubr.bf16.mxu0 0
        %1069 = vmatmul.mubr.bf16.gmra.mxu0 %v1030
        %v1070 = vpop.f32.mrf.mxu0
        %v1071 = vadd.f32 0.0, %v1070
        %v1072 = vpop.f32.mrf.mxu0
        %v1073 = vpop.f32.mrf.mxu0
        %v1074 = vpop.f32.mrf.mxu0
        %1075 = vdwg.mxu0
        %v1077 = vsel %vm1004, %v1028, 0
        %v1080 = vsel %vm1032, %v904, 0
        %1082 = vmatprep.subr.bf16.mxu0 0
        %1083 = vmatpush1.bf16.msra.mxu0 0
        %1084 = vmatprep.subr.bf16.mxu0 0
        %1085 = vmatpush1.bf16.msra.mxu0 0
        %1086 = vmatprep.subr.bf16.mxu0 0
        %1087 = vmatpush1.bf16.msra.mxu0 0
        %1088 = vmatprep.subr.bf16.mxu0 0
        %1089 = vmatpush1.bf16.msra.mxu0 0
        %1090 = vmatprep.subr.bf16.mxu0 0
        %1091 = vmatpush1.bf16.msra.mxu0 0
        %1092 = vmatprep.subr.bf16.mxu0 0
        %1093 = vmatpush1.bf16.msra.mxu0 0
        %1094 = vmatprep.subr.bf16.mxu0 0
        %1095 = vmatpush1.bf16.msra.mxu0 0
        %1096 = vmatprep.subr.bf16.mxu0 0
        %1097 = vmatpush1.bf16.msra.mxu0 %v1080
        %1098 = vmatprep.subr.bf16.mxu0 0
        %1099 = vmatpush2.bf16.msra.mxu0 0
        %1100 = vmatprep.subr.bf16.mxu0 0
        %1101 = vmatpush2.bf16.msra.mxu0 0
        %1102 = vmatprep.subr.bf16.mxu0 0
        %1103 = vmatpush2.bf16.msra.mxu0 0
        %1104 = vmatprep.subr.bf16.mxu0 0
        %1105 = vmatpush2.bf16.msra.mxu0 0
        %1106 = vmatprep.subr.bf16.mxu0 0
        %1107 = vmatpush2.bf16.msra.mxu0 0
        %1108 = vmatprep.subr.bf16.mxu0 0
        %1109 = vmatpush2.bf16.msra.mxu0 0
        %1110 = vmatprep.subr.bf16.mxu0 0
        %1111 = vmatpush2.bf16.msra.mxu0 0
        %1112 = vmatprep.subr.bf16.mxu0 0
        %1113 = vmatpush2.bf16.msra.mxu0 0
        %1114 = vmatprep.mubr.bf16.mxu0 0
        %1115 = vmatmul.mubr.bf16.gmra.mxu0 %v1077
        %v1116 = vpop.f32.mrf.mxu0
        %v1117 = vadd.f32 0.0, %v1116
        %v1118 = vpop.f32.mrf.mxu0
        %v1119 = vpop.f32.mrf.mxu0
        %v1120 = vpop.f32.mrf.mxu0
        %1121 = vdwg.mxu0
        %1122 = vrot.lane.b32.xlu0 %v901, 96
        %v1123 = vpop.permute.xlu0 %1122
        %1124 = vrot.lane.b32.xlu0 %v901, 32
        %v1125 = vpop.permute.xlu0 %1124
        %v1127 = vsel %vm908, %v1123, 0
        %v1130 = vsel %vm908, %v1125, 0
        %1132 = vmatprep.subr.bf16.mxu0 0
        %1133 = vmatpush1.bf16.xpose.msra.mxu0 0
        %1134 = vmatprep.subr.bf16.mxu0 0
        %1135 = vmatpush1.bf16.xpose.msra.mxu0 0
        %1136 = vmatprep.subr.bf16.mxu0 0
        %1137 = vmatpush1.bf16.xpose.msra.mxu0 0
        %1138 = vmatprep.subr.bf16.mxu0 0
        %1139 = vmatpush1.bf16.xpose.msra.mxu0 0
        %1140 = vmatprep.subr.bf16.mxu0 0
        %1141 = vmatpush1.bf16.xpose.msra.mxu0 0
        %1142 = vmatprep.subr.bf16.mxu0 0
        %1143 = vmatpush1.bf16.xpose.msra.mxu0 0
        %1144 = vmatprep.subr.bf16.mxu0 0
        %1145 = vmatpush1.bf16.xpose.msra.mxu0 0
        %1146 = vmatprep.subr.bf16.mxu0 0
        %1147 = vmatpush1.bf16.xpose.msra.mxu0 %v1130
        %1148 = vmatprep.subr.bf16.mxu0 0
        %1149 = vmatpush2.bf16.xpose.msra.mxu0 0
        %1150 = vmatprep.subr.bf16.mxu0 0
        %1151 = vmatpush2.bf16.xpose.msra.mxu0 0
        %1152 = vmatprep.subr.bf16.mxu0 0
        %1153 = vmatpush2.bf16.xpose.msra.mxu0 0
        %1154 = vmatprep.subr.bf16.mxu0 0
        %1155 = vmatpush2.bf16.xpose.msra.mxu0 0
        %1156 = vmatprep.subr.bf16.mxu0 0
        %1157 = vmatpush2.bf16.xpose.msra.mxu0 0
        %1158 = vmatprep.subr.bf16.mxu0 0
        %1159 = vmatpush2.bf16.xpose.msra.mxu0 0
        %1160 = vmatprep.subr.bf16.mxu0 0
        %1161 = vmatpush2.bf16.xpose.msra.mxu0 0
        %1162 = vmatprep.subr.bf16.mxu0 0
        %1163 = vmatpush2.bf16.xpose.msra.mxu0 0
        %1164 = vmatprep.mubr.bf16.mxu0 0
        %1165 = vmatmul.mubr.bf16.gmra.mxu0 %v1127
        %v1166 = vpop.f32.mrf.mxu0
        %v1167 = vadd.f32 0.0, %v1166
        %v1168 = vpop.f32.mrf.mxu0
        %v1169 = vpop.f32.mrf.mxu0
        %v1170 = vpop.f32.mrf.mxu0
        %1171 = vdwg.mxu0
        %1172 = vrot.lane.b32.xlu0 %v902, 96
        %v1173 = vpop.permute.xlu0 %1172
        %1174 = vrot.lane.b32.xlu0 %v902, 32
        %v1175 = vpop.permute.xlu0 %1174
        %v1177 = vsel %vm908, %v1173, 0
        %v1180 = vsel %vm908, %v1175, 0
        %1182 = vmatprep.subr.bf16.mxu0 0
        %1183 = vmatpush1.bf16.xpose.msra.mxu0 0
        %1184 = vmatprep.subr.bf16.mxu0 0
        %1185 = vmatpush1.bf16.xpose.msra.mxu0 0
        %1186 = vmatprep.subr.bf16.mxu0 0
        %1187 = vmatpush1.bf16.xpose.msra.mxu0 0
        %1188 = vmatprep.subr.bf16.mxu0 0
        %1189 = vmatpush1.bf16.xpose.msra.mxu0 0
        %1190 = vmatprep.subr.bf16.mxu0 0
        %1191 = vmatpush1.bf16.xpose.msra.mxu0 0
        %1192 = vmatprep.subr.bf16.mxu0 0
        %1193 = vmatpush1.bf16.xpose.msra.mxu0 0
        %1194 = vmatprep.subr.bf16.mxu0 0
        %1195 = vmatpush1.bf16.xpose.msra.mxu0 0
        %1196 = vmatprep.subr.bf16.mxu0 0
        %1197 = vmatpush1.bf16.xpose.msra.mxu0 %v1180
        %1198 = vmatprep.subr.bf16.mxu0 0
        %1199 = vmatpush2.bf16.xpose.msra.mxu0 0
        %1200 = vmatprep.subr.bf16.mxu0 0
        %1201 = vmatpush2.bf16.xpose.msra.mxu0 0
        %1202 = vmatprep.subr.bf16.mxu0 0
        %1203 = vmatpush2.bf16.xpose.msra.mxu0 0
        %1204 = vmatprep.subr.bf16.mxu0 0
        %1205 = vmatpush2.bf16.xpose.msra.mxu0 0
        %1206 = vmatprep.subr.bf16.mxu0 0
        %1207 = vmatpush2.bf16.xpose.msra.mxu0 0
        %1208 = vmatprep.subr.bf16.mxu0 0
        %1209 = vmatpush2.bf16.xpose.msra.mxu0 0
        %1210 = vmatprep.subr.bf16.mxu0 0
        %1211 = vmatpush2.bf16.xpose.msra.mxu0 0
        %1212 = vmatprep.subr.bf16.mxu0 0
        %1213 = vmatpush2.bf16.xpose.msra.mxu0 0
        %1214 = vmatprep.mubr.bf16.mxu0 0
        %1215 = vmatmul.mubr.bf16.gmra.mxu0 %v1177
        %v1216 = vpop.f32.mrf.mxu0
        %v1217 = vadd.f32 0.0, %v1216
        %v1218 = vpop.f32.mrf.mxu0
        %v1219 = vpop.f32.mrf.mxu0
        %v1220 = vpop.f32.mrf.mxu0
        %1221 = vdwg.mxu0
        %v1222 = vsel %vm1004, %v1167, -inf
        %1223 = vmax.xlane.f32.xlu0 %v1222
        %v1224 = vpop.xlane.xlu0 %1223
        %v1225 = vsel %vm1004, %v1217, -inf
        %1226 = vmax.xlane.f32.xlu0 %v1225
        %v1227 = vpop.xlane.xlu0 %1226
        %v1228 = vsub.f32 %v1167, %v1224
        %v1229 = vsub.f32 %v1217, %v1227
        %v1230 = vmul.f32 %v1228, 1.442695
        %v1231 = vpow.pop %v1230
        %v1232 = vmul.f32 %v1229, 1.442695
        %v1233 = vpow.pop %v1232
        %v1234 = vsel %vm1004, %v1231, 0.0
        %1235 = vadd.xlane.f32.xlu0 %v1234
        %v1236 = vpop.xlane.xlu0 %1235
        %v1237 = vsel %vm1004, %v1233, 0.0
        %1238 = vadd.xlane.f32.xlu0 %v1237
        %v1239 = vpop.xlane.xlu0 %1238
        %v1240 = vrcp.pop %v1236
        %v1241 = vrcp.pop %v1239
        %v1242 = vmul.f32 %v1231, %v1240
        %v1243 = vmul.f32 %v1233, %v1241
        %v1244 = vpack.c.bf16 %v1242, %v1242
        %v1245 = vpack.c.bf16 %v1243, %v1243
        %1247 = vrot.lane.b32.xlu0 %v903, 96
        %v1248 = vpop.permute.xlu0 %1247
        %v1250 = vsel %vm1004, %v1244, 0
        %v1253 = vsel %vm1032, %v1248, 0
        %1255 = vmatprep.subr.bf16.mxu0 0
        %1256 = vmatpush1.bf16.msra.mxu0 0
        %1257 = vmatprep.subr.bf16.mxu0 0
        %1258 = vmatpush1.bf16.msra.mxu0 0
        %1259 = vmatprep.subr.bf16.mxu0 0
        %1260 = vmatpush1.bf16.msra.mxu0 0
        %1261 = vmatprep.subr.bf16.mxu0 0
        %1262 = vmatpush1.bf16.msra.mxu0 0
        %1263 = vmatprep.subr.bf16.mxu0 0
        %1264 = vmatpush1.bf16.msra.mxu0 0
        %1265 = vmatprep.subr.bf16.mxu0 0
        %1266 = vmatpush1.bf16.msra.mxu0 0
        %1267 = vmatprep.subr.bf16.mxu0 0
        %1268 = vmatpush1.bf16.msra.mxu0 0
        %1269 = vmatprep.subr.bf16.mxu0 0
        %1270 = vmatpush1.bf16.msra.mxu0 %v1253
        %1271 = vmatprep.subr.bf16.mxu0 0
        %1272 = vmatpush2.bf16.msra.mxu0 0
        %1273 = vmatprep.subr.bf16.mxu0 0
        %1274 = vmatpush2.bf16.msra.mxu0 0
        %1275 = vmatprep.subr.bf16.mxu0 0
        %1276 = vmatpush2.bf16.msra.mxu0 0
        %1277 = vmatprep.subr.bf16.mxu0 0
        %1278 = vmatpush2.bf16.msra.mxu0 0
        %1279 = vmatprep.subr.bf16.mxu0 0
        %1280 = vmatpush2.bf16.msra.mxu0 0
        %1281 = vmatprep.subr.bf16.mxu0 0
        %1282 = vmatpush2.bf16.msra.mxu0 0
        %1283 = vmatprep.subr.bf16.mxu0 0
        %1284 = vmatpush2.bf16.msra.mxu0 0
        %1285 = vmatprep.subr.bf16.mxu0 0
        %1286 = vmatpush2.bf16.msra.mxu0 0
        %1287 = vmatprep.mubr.bf16.mxu0 0
        %1288 = vmatmul.mubr.bf16.gmra.mxu0 %v1250
        %v1289 = vpop.f32.mrf.mxu0
        %v1290 = vadd.f32 0.0, %v1289
        %v1291 = vpop.f32.mrf.mxu0
        %v1292 = vpop.f32.mrf.mxu0
        %v1293 = vpop.f32.mrf.mxu0
        %1294 = vdwg.mxu0
        %1296 = vrot.lane.b32.xlu0 %v904, 96
        %v1297 = vpop.permute.xlu0 %1296
        %v1299 = vsel %vm1004, %v1245, 0
        %v1302 = vsel %vm1032, %v1297, 0
        %1304 = vmatprep.subr.bf16.mxu0 0
        %1305 = vmatpush1.bf16.msra.mxu0 0
        %1306 = vmatprep.subr.bf16.mxu0 0
        %1307 = vmatpush1.bf16.msra.mxu0 0
        %1308 = vmatprep.subr.bf16.mxu0 0
        %1309 = vmatpush1.bf16.msra.mxu0 0
        %1310 = vmatprep.subr.bf16.mxu0 0
        %1311 = vmatpush1.bf16.msra.mxu0 0
        %1312 = vmatprep.subr.bf16.mxu0 0
        %1313 = vmatpush1.bf16.msra.mxu0 0
        %1314 = vmatprep.subr.bf16.mxu0 0
        %1315 = vmatpush1.bf16.msra.mxu0 0
        %1316 = vmatprep.subr.bf16.mxu0 0
        %1317 = vmatpush1.bf16.msra.mxu0 0
        %1318 = vmatprep.subr.bf16.mxu0 0
        %1319 = vmatpush1.bf16.msra.mxu0 %v1302
        %1320 = vmatprep.subr.bf16.mxu0 0
        %1321 = vmatpush2.bf16.msra.mxu0 0
        %1322 = vmatprep.subr.bf16.mxu0 0
        %1323 = vmatpush2.bf16.msra.mxu0 0
        %1324 = vmatprep.subr.bf16.mxu0 0
        %1325 = vmatpush2.bf16.msra.mxu0 0
        %1326 = vmatprep.subr.bf16.mxu0 0
        %1327 = vmatpush2.bf16.msra.mxu0 0
        %1328 = vmatprep.subr.bf16.mxu0 0
        %1329 = vmatpush2.bf16.msra.mxu0 0
        %1330 = vmatprep.subr.bf16.mxu0 0
        %1331 = vmatpush2.bf16.msra.mxu0 0
        %1332 = vmatprep.subr.bf16.mxu0 0
        %1333 = vmatpush2.bf16.msra.mxu0 0
        %1334 = vmatprep.subr.bf16.mxu0 0
        %1335 = vmatpush2.bf16.msra.mxu0 0
        %1336 = vmatprep.mubr.bf16.mxu0 0
        %1337 = vmatmul.mubr.bf16.gmra.mxu0 %v1299
        %v1338 = vpop.f32.mrf.mxu0
        %v1339 = vadd.f32 0.0, %v1338
        %v1340 = vpop.f32.mrf.mxu0
        %v1341 = vpop.f32.mrf.mxu0
        %v1342 = vpop.f32.mrf.mxu0
        %1343 = vdwg.mxu0
        %1346 = vrot.lane.b32.xlu0 %v1290, 32
        %v1347 = vpop.permute.xlu0 %1346
        %1348 = vrot.lane.b32.xlu0 %v1339, 32
        %v1349 = vpop.permute.xlu0 %1348
        %v1352 = vsel %vm908, %v1071, %v1347
        %v1353 = vsel %vm908, %v1117, %v1349
        %v1354 = vpack.c.bf16 %v1353, %v1352
        %v1355 = vld [vmem:[%s633] sm:$0xf]
        %v1356 = vld [vmem:[%s633 + $0x4] sm:$0xf]
        %v1357 = vld [vmem:[%s633 + $0x8] sm:$0xf]
        %v1358 = vld [vmem:[%s633 + $0xc] sm:$0xf]
        %v1359 = vld [vmem:[%s633 + $0x10] sm:$0xf]
        %v1360 = vld [vmem:[%s633 + $0x14] sm:$0xf]
        %v1361 = vld [vmem:[%s633 + $0x18] sm:$0xf]
        %v1362 = vld [vmem:[%s633 + $0x1c] sm:$0xf]
        %v1363 = vld [vmem:[%s734] sm:$0x1]
        %v1365 = vlaneseq
        %v1366 = vshrl.u32 %v1365, 7
        %v1367 = vsub.s32 0, %v1366
        %v1368 = vrot.slane %v1363, %v1367
        %v1378 = vunpack.c.l.b16 %v1355
        %v1379 = vunpack.c.l.b16 %v1356
        %v1380 = vunpack.c.l.b16 %v1357
        %v1381 = vunpack.c.l.b16 %v1358
        %v1382 = vunpack.c.l.b16 %v1359
        %v1383 = vunpack.c.l.b16 %v1360
        %v1384 = vunpack.c.l.b16 %v1361
        %v1385 = vunpack.c.l.b16 %v1362
        %v1386 = vpack.c.b16 %v1379, %v1378
        %v1387 = vpack.c.b16 %v1381, %v1380
        %v1388 = vpack.c.b16 %v1383, %v1382
        %v1389 = vpack.c.b16 %v1385, %v1384
        %v1395 = vsel %vm762, %v1354, 0
        %1397 = vmatprep.subr.bf16.mxu0 0
        %1398 = vmatpush1.bf16.msra.mxu0 0
        %1399 = vmatprep.subr.bf16.mxu0 0
        %1400 = vmatpush1.bf16.msra.mxu0 0
        %1401 = vmatprep.subr.bf16.mxu0 0
        %1402 = vmatpush1.bf16.msra.mxu0 0
        %1403 = vmatprep.subr.bf16.mxu0 0
        %1404 = vmatpush1.bf16.msra.mxu0 0
        %1405 = vmatprep.subr.bf16.mxu0 0
        %1406 = vmatpush1.bf16.msra.mxu0 %v1389
        %1407 = vmatprep.subr.bf16.mxu0 0
        %1408 = vmatpush1.bf16.msra.mxu0 %v1388
        %1409 = vmatprep.subr.bf16.mxu0 0
        %1410 = vmatpush1.bf16.msra.mxu0 %v1387
        %1411 = vmatprep.subr.bf16.mxu0 0
        %1412 = vmatpush1.bf16.msra.mxu0 %v1386
        %1413 = vmatprep.subr.bf16.mxu0 0
        %1414 = vmatpush2.bf16.msra.mxu0 0
        %1415 = vmatprep.subr.bf16.mxu0 0
        %1416 = vmatpush2.bf16.msra.mxu0 0
        %1417 = vmatprep.subr.bf16.mxu0 0
        %1418 = vmatpush2.bf16.msra.mxu0 0
        %1419 = vmatprep.subr.bf16.mxu0 0
        %1420 = vmatpush2.bf16.msra.mxu0 0
        %1421 = vmatprep.subr.bf16.mxu0 0
        %1422 = vmatpush2.bf16.msra.mxu0 0
        %1423 = vmatprep.subr.bf16.mxu0 0
        %1424 = vmatpush2.bf16.msra.mxu0 0
        %1425 = vmatprep.subr.bf16.mxu0 0
        %1426 = vmatpush2.bf16.msra.mxu0 0
        %1427 = vmatprep.subr.bf16.mxu0 0
        %1428 = vmatpush2.bf16.msra.mxu0 0
        %1429 = vmatprep.mubr.bf16.mxu0 0
        %1430 = vmatmul.mubr.bf16.gmra.mxu0 %v1395
        %v1431 = vpop.f32.mrf.mxu0
        %v1432 = vadd.f32 %v1368, %v1431
        %v1433 = vpop.f32.mrf.mxu0
        %v1434 = vpop.f32.mrf.mxu0
        %v1435 = vadd.f32 %v1368, %v1434
        %v1436 = vpop.f32.mrf.mxu0
        %1437 = vdwg.mxu0
        %v1438 = vadd.f32 %v758, %v1432
        %v1439 = vadd.f32 %v759, %v1435
        %v1440 = vld [vmem:[%s737] sm:$0x1]
        %v1441 = vld [vmem:[%s740] sm:$0x1]
        %v1442 = vsel %vm762, %v1438, 0.0
        %1443 = vadd.xlane.f32.xlu0 %v1442
        %v1444 = vpop.xlane.xlu0 %1443
        %v1445 = vsel %vm762, %v1439, 0.0
        %1446 = vadd.xlane.f32.xlu0 %v1445
        %v1447 = vpop.xlane.xlu0 %1446
        %v1448 = vmul.f32 %v1444, %v769
        %v1449 = vmul.f32 %v1447, %v769
        %v1450 = vsub.f32 %v1438, %v1448
        %v1451 = vsub.f32 %v1439, %v1449
        %v1452 = vmul.f32 %v1450, %v1450
        %v1453 = vmul.f32 %v1451, %v1451
        %v1454 = vsel %vm762, %v1452, 0.0
        %1455 = vadd.xlane.f32.xlu0 %v1454
        %v1456 = vpop.xlane.xlu0 %1455
        %v1457 = vsel %vm762, %v1453, 0.0
        %1458 = vadd.xlane.f32.xlu0 %v1457
        %v1459 = vpop.xlane.xlu0 %1458
        %v1460 = vmul.f32 %v1456, %v769
        %v1461 = vmul.f32 %v1459, %v769
        %v1462 = vadd.f32 %v1460, 1e-05
        %v1463 = vadd.f32 %v1461, 1e-05
        %v1464 = vrsqrt.pop %v1462
        %v1465 = vrsqrt.pop %v1463
        %v1466 = vmul.f32 %v1450, %v1464
        %v1467 = vmul.f32 %v1451, %v1465
        %v1469 = vlaneseq
        %v1470 = vshrl.u32 %v1469, 7
        %v1471 = vsub.s32 0, %v1470
        %v1472 = vrot.slane %v1440, %v1471
        %v1474 = vmul.f32 %v1466, %v1472
        %v1475 = vmul.f32 %v1467, %v1472
        %v1477 = vlaneseq
        %v1478 = vshrl.u32 %v1477, 7
        %v1479 = vsub.s32 0, %v1478
        %v1480 = vrot.slane %v1441, %v1479
        %v1482 = vadd.f32 %v1474, %v1480
        %v1483 = vadd.f32 %v1475, %v1480
        %v1484 = vpack.c.bf16 %v1483, %v1482
        %v1485 = vld [vmem:[%s642] sm:$0xf]
        %v1486 = vld [vmem:[%s642 + $0x4] sm:$0xf]
        %v1487 = vld [vmem:[%s642 + $0x8] sm:$0xf]
        %v1488 = vld [vmem:[%s642 + $0xc] sm:$0xf]
        %v1489 = vld [vmem:[%s642 + $0x10] sm:$0xf]
        %v1490 = vld [vmem:[%s642 + $0x14] sm:$0xf]
        %v1491 = vld [vmem:[%s642 + $0x18] sm:$0xf]
        %v1492 = vld [vmem:[%s642 + $0x1c] sm:$0xf]
        %v1493 = vld [vmem:[%s743] sm:$0x1]
        %v1495 = vlaneseq
        %v1496 = vshrl.u32 %v1495, 7
        %v1497 = vsub.s32 0, %v1496
        %v1498 = vrot.slane %v1493, %v1497
        %v1508 = vunpack.c.l.b16 %v1485
        %v1509 = vunpack.c.l.b16 %v1486
        %v1510 = vunpack.c.l.b16 %v1487
        %v1511 = vunpack.c.l.b16 %v1488
        %v1512 = vunpack.c.l.b16 %v1489
        %v1513 = vunpack.c.l.b16 %v1490
        %v1514 = vunpack.c.l.b16 %v1491
        %v1515 = vunpack.c.l.b16 %v1492
        %v1516 = vpack.c.b16 %v1509, %v1508
        %v1517 = vpack.c.b16 %v1511, %v1510
        %v1518 = vpack.c.b16 %v1513, %v1512
        %v1519 = vpack.c.b16 %v1515, %v1514
        %v1525 = vsel %vm762, %v1484, 0
        %1527 = vmatprep.subr.bf16.mxu0 0
        %1528 = vmatpush1.bf16.msra.mxu0 0
        %1529 = vmatprep.subr.bf16.mxu0 0
        %1530 = vmatpush1.bf16.msra.mxu0 0
        %1531 = vmatprep.subr.bf16.mxu0 0
        %1532 = vmatpush1.bf16.msra.mxu0 0
        %1533 = vmatprep.subr.bf16.mxu0 0
        %1534 = vmatpush1.bf16.msra.mxu0 0
        %1535 = vmatprep.subr.bf16.mxu0 0
        %1536 = vmatpush1.bf16.msra.mxu0 %v1519
        %1537 = vmatprep.subr.bf16.mxu0 0
        %1538 = vmatpush1.bf16.msra.mxu0 %v1518
        %1539 = vmatprep.subr.bf16.mxu0 0
        %1540 = vmatpush1.bf16.msra.mxu0 %v1517
        %1541 = vmatprep.subr.bf16.mxu0 0
        %1542 = vmatpush1.bf16.msra.mxu0 %v1516
        %1543 = vmatprep.subr.bf16.mxu0 0
        %1544 = vmatpush2.bf16.msra.mxu0 0
        %1545 = vmatprep.subr.bf16.mxu0 0
        %1546 = vmatpush2.bf16.msra.mxu0 0
        %1547 = vmatprep.subr.bf16.mxu0 0
        %1548 = vmatpush2.bf16.msra.mxu0 0
        %1549 = vmatprep.subr.bf16.mxu0 0
        %1550 = vmatpush2.bf16.msra.mxu0 0
        %1551 = vmatprep.subr.bf16.mxu0 0
        %1552 = vmatpush2.bf16.msra.mxu0 0
        %1553 = vmatprep.subr.bf16.mxu0 0
        %1554 = vmatpush2.bf16.msra.mxu0 0
        %1555 = vmatprep.subr.bf16.mxu0 0
        %1556 = vmatpush2.bf16.msra.mxu0 0
        %1557 = vmatprep.subr.bf16.mxu0 0
        %1558 = vmatpush2.bf16.msra.mxu0 0
        %1559 = vmatprep.mubr.bf16.mxu0 0
        %1560 = vmatmul.mubr.bf16.gmra.mxu0 %v1525
        %v1561 = vpop.f32.mrf.mxu0
        %v1562 = vadd.f32 %v1498, %v1561
        %v1563 = vpop.f32.mrf.mxu0
        %v1564 = vpop.f32.mrf.mxu0
        %v1565 = vadd.f32 %v1498, %v1564
        %v1566 = vpop.f32.mrf.mxu0
        %1567 = vdwg.mxu0
        %v1568 = vmul.f32 %v1562, 0.5
        %v1569 = vmul.f32 %v1565, 0.5
        %v1570 = vmul.f32 %v1562, 0.044715
        %v1571 = vmul.f32 %v1565, 0.044715
        %v1572 = vmul.f32 %v1570, %v1562
        %v1573 = vmul.f32 %v1571, %v1565
        %v1574 = vmul.f32 %v1572, %v1562
        %v1575 = vmul.f32 %v1573, %v1565
        %v1576 = vadd.f32 %v1562, %v1574
        %v1577 = vadd.f32 %v1565, %v1575
        %v1578 = vmul.f32 %v1576, 0.7978846
        %v1579 = vmul.f32 %v1577, 0.7978846
        %v1580 = vtanh.pop %v1578
        %v1581 = vtanh.pop %v1579
        %v1582 = vadd.f32 %v1580, 1.0
        %v1583 = vadd.f32 %v1581, 1.0
        %v1584 = vmul.f32 %v1568, %v1582
        %v1585 = vmul.f32 %v1569, %v1583
        %v1586 = vpack.c.bf16 %v1585, %v1584
        %v1587 = vld [vmem:[%s651] sm:$0xf]
        %v1588 = vld [vmem:[%s651 + $0x4] sm:$0xf]
        %v1589 = vld [vmem:[%s651 + $0x8] sm:$0xf]
        %v1590 = vld [vmem:[%s651 + $0xc] sm:$0xf]
        %v1591 = vld [vmem:[%s651 + $0x10] sm:$0xf]
        %v1592 = vld [vmem:[%s651 + $0x14] sm:$0xf]
        %v1593 = vld [vmem:[%s651 + $0x18] sm:$0xf]
        %v1594 = vld [vmem:[%s651 + $0x1c] sm:$0xf]
        %v1595 = vld [vmem:[%s746] sm:$0x1]
        %v1597 = vlaneseq
        %v1598 = vshrl.u32 %v1597, 7
        %v1599 = vsub.s32 0, %v1598
        %v1600 = vrot.slane %v1595, %v1599
        %v1610 = vunpack.c.l.b16 %v1587
        %v1611 = vunpack.c.l.b16 %v1588
        %v1612 = vunpack.c.l.b16 %v1589
        %v1613 = vunpack.c.l.b16 %v1590
        %v1614 = vunpack.c.l.b16 %v1591
        %v1615 = vunpack.c.l.b16 %v1592
        %v1616 = vunpack.c.l.b16 %v1593
        %v1617 = vunpack.c.l.b16 %v1594
        %v1618 = vpack.c.b16 %v1611, %v1610
        %v1619 = vpack.c.b16 %v1613, %v1612
        %v1620 = vpack.c.b16 %v1615, %v1614
        %v1621 = vpack.c.b16 %v1617, %v1616
        %v1627 = vsel %vm762, %v1586, 0
        %1629 = vmatprep.subr.bf16.mxu0 0
        %1630 = vmatpush1.bf16.msra.mxu0 0
        %1631 = vmatprep.subr.bf16.mxu0 0
        %1632 = vmatpush1.bf16.msra.mxu0 0
        %1633 = vmatprep.subr.bf16.mxu0 0
        %1634 = vmatpush1.bf16.msra.mxu0 0
        %1635 = vmatprep.subr.bf16.mxu0 0
        %1636 = vmatpush1.bf16.msra.mxu0 0
        %1637 = vmatprep.subr.bf16.mxu0 0
        %1638 = vmatpush1.bf16.msra.mxu0 %v1621
        %1639 = vmatprep.subr.bf16.mxu0 0
        %1640 = vmatpush1.bf16.msra.mxu0 %v1620
        %1641 = vmatprep.subr.bf16.mxu0 0
        %1642 = vmatpush1.bf16.msra.mxu0 %v1619
        %1643 = vmatprep.subr.bf16.mxu0 0
        %1644 = vmatpush1.bf16.msra.mxu0 %v1618
        %1645 = vmatprep.subr.bf16.mxu0 0
        %1646 = vmatpush2.bf16.msra.mxu0 0
        %1647 = vmatprep.subr.bf16.mxu0 0
        %1648 = vmatpush2.bf16.msra.mxu0 0
        %1649 = vmatprep.subr.bf16.mxu0 0
        %1650 = vmatpush2.bf16.msra.mxu0 0
        %1651 = vmatprep.subr.bf16.mxu0 0
        %1652 = vmatpush2.bf16.msra.mxu0 0
        %1653 = vmatprep.subr.bf16.mxu0 0
        %1654 = vmatpush2.bf16.msra.mxu0 0
        %1655 = vmatprep.subr.bf16.mxu0 0
        %1656 = vmatpush2.bf16.msra.mxu0 0
        %1657 = vmatprep.subr.bf16.mxu0 0
        %1658 = vmatpush2.bf16.msra.mxu0 0
        %1659 = vmatprep.subr.bf16.mxu0 0
        %1660 = vmatpush2.bf16.msra.mxu0 0
        %1661 = vmatprep.mubr.bf16.mxu0 0
        %1662 = vmatmul.mubr.bf16.gmra.mxu0 %v1627
        %v1663 = vpop.f32.mrf.mxu0
        %v1664 = vadd.f32 %v1600, %v1663
        %v1665 = vpop.f32.mrf.mxu0
        %v1666 = vpop.f32.mrf.mxu0
        %v1667 = vadd.f32 %v1600, %v1666
        %v1668 = vpop.f32.mrf.mxu0
        %1669 = vdwg.mxu0
        %v1670 = vadd.f32 %v1482, %v1664
        %v1671 = vadd.f32 %v1483, %v1667
        %1672 = vst.msk [vmem:[#allocation13] sm:$0xff] %vm762, %v1670
        %1673 = vst.msk [vmem:[#allocation13 + $0x8] sm:$0xff] %vm762, %v1671
        %p1674 = scmp.eq.s32.totalorder %s41, 1
        // Predicated region
        $region105: #{tpu_custom_call.1} parent=75 // pred_check
          %p1675 = pneg %p1674
        $region106: #{tpu_custom_call.1} parent=75 // pred_check_branch
          %1677 = sbr.rel (%p1675) target = $region108
        $region107: #{tpu_custom_call.1} parent=75 // pred_region
          %v1678 = vld [vmem:[%s12] sm:$0x1]
          %v1679 = vld [vmem:[%s13] sm:$0x1]
          %v1680 = vsel %vm762, %v1670, 0.0
          %1681 = vadd.xlane.f32.xlu0 %v1680
          %v1682 = vpop.xlane.xlu0 %1681
          %v1683 = vsel %vm762, %v1671, 0.0
          %1684 = vadd.xlane.f32.xlu0 %v1683
          %v1685 = vpop.xlane.xlu0 %1684
          %v1686 = vmul.f32 %v1682, %v769
          %v1687 = vmul.f32 %v1685, %v769
          %v1688 = vsub.f32 %v1670, %v1686
          %v1689 = vsub.f32 %v1671, %v1687
          %v1690 = vmul.f32 %v1688, %v1688
          %v1691 = vmul.f32 %v1689, %v1689
          %v1692 = vsel %vm762, %v1690, 0.0
          %1693 = vadd.xlane.f32.xlu0 %v1692
          %v1694 = vpop.xlane.xlu0 %1693
          %v1695 = vsel %vm762, %v1691, 0.0
          %1696 = vadd.xlane.f32.xlu0 %v1695
          %v1697 = vpop.xlane.xlu0 %1696
          %v1698 = vmul.f32 %v1694, %v769
          %v1699 = vmul.f32 %v1697, %v769
          %v1700 = vadd.f32 %v1698, 1e-05
          %v1701 = vadd.f32 %v1699, 1e-05
          %v1702 = vrsqrt.pop %v1700
          %v1703 = vrsqrt.pop %v1701
          %v1704 = vmul.f32 %v1688, %v1702
          %v1705 = vmul.f32 %v1689, %v1703
          %v1707 = vlaneseq
          %v1708 = vshrl.u32 %v1707, 7
          %v1709 = vsub.s32 0, %v1708
          %v1710 = vrot.slane %v1678, %v1709
          %v1712 = vmul.f32 %v1704, %v1710
          %v1713 = vmul.f32 %v1705, %v1710
          %v1715 = vlaneseq
          %v1716 = vshrl.u32 %v1715, 7
          %v1717 = vsub.s32 0, %v1716
          %v1718 = vrot.slane %v1679, %v1717
          %v1720 = vadd.f32 %v1712, %v1718
          %v1721 = vadd.f32 %v1713, %v1718
          %1722 = vst.msk [vmem:[#allocation13] sm:$0xff] %vm762, %v1720
          %1723 = vst.msk [vmem:[#allocation13 + $0x8] sm:$0xff] %vm762, %v1721
        $region108: #{tpu_custom_call.1} parent=75 // pred_fallthru
          _
        // Predicated region
        $region109: #{tpu_custom_call.1} parent=75 // pred_check
          %p1724 = pneg %p420
        $region110: #{tpu_custom_call.1} parent=75 // pred_check_branch
          %1726 = sbr.rel (%p1724) target = $region112
        $region111: #{tpu_custom_call.1} parent=75 // pred_region
          %s1727 = smul.u32 2, %s40
          %s1729 = ssub.s32 256, 256
          %1730 = vsyncadd [#allocation4], %s1729
          %s1731 = smul.addr %s1727, 128
          %s1732 = scalar_lea.hbm %s14, %s1731
          %s1733 = sshll.u32 [#allocation13], 4
          %s1734 = int_to_ptr.vmem [resolvable:$true] %s1733
          %1739 = dma.vmem_to_hbm [thread:$0]  %s1734, 256, %s1732, [#allocation4], 128, 128, 8
        $region112: #{tpu_custom_call.1} parent=75 // pred_fallthru
          _
        // Predicated region
        $region113: #{tpu_custom_call.1} parent=75 // pred_check
          %p1740 = pneg %p420
        $region114: #{tpu_custom_call.1} parent=75 // pred_check_branch
          %1742 = sbr.rel (%p1740) target = $region116
        $region115: #{tpu_custom_call.1} parent=75 // pred_region
          %1743 = dma.done [#allocation4], 256
        $region116: #{tpu_custom_call.1} parent=75 // pred_fallthru
          _
      $region76: #{tpu_custom_call.1} parent=5 // pred_fallthru
        _
      %p1744 = scmp.le.s32.totalorder 2, %s31
      // Predicated region
      $region117: #{tpu_custom_call.1} parent=5 // pred_check
        %p1745 = pneg %p1744
      $region118: #{tpu_custom_call.1} parent=5 // pred_check_branch
        %1747 = sbr.rel (%p1745) target = $region120
      $region119: #{tpu_custom_call.1} parent=5 // pred_region
        %s1748 = ssub.s32 %s31, 2
      $region120: #{tpu_custom_call.1} parent=5 // pred_fallthru
        _
    $region6: #{tpu_custom_call.1} parent=1 // loop_footer
      %s35 = sadd.s32 1, %s31
    $region7: #{tpu_custom_call.1} parent=1 // loop_footer_branch
      %30 = sbr.rel target = $region3
    $region8: #{tpu_custom_call.1} parent=1 // loop_exit
      _
    %1749 = vsyncpa [#allocation3], 1
    %s1750 = scalar_lea.sflag [#allocation3], 1
    %1751 = vsyncpa %s1750, 1
    %1752 = vsyncpa [#allocation6], 1
    %s1753 = scalar_lea.sflag [#allocation6], 1
    %1754 = vsyncpa %s1753, 1
    %1755 = vsyncpa [#allocation9], 1
    %s1756 = scalar_lea.sflag [#allocation9], 1
    %1757 = vsyncpa %s1756, 1
    %1758 = vsyncpa [#allocation12], 1
    %s1759 = scalar_lea.sflag [#allocation12], 1
    %1760 = vsyncpa %s1759, 1
    %1761 = vsyncpa [#allocation4], 1
    %s1762 = scalar_lea.sflag [#allocation4], 1
    %1763 = vsyncpa %s1762, 1

</llo_original>
